<compile_context>
chip_gen: v6e
topology: v6e:2x2x1
jax: 0.10.0
libtpu: 0.0.40
codegen_flags: <defaults>
</compile_context>

<pallas_src>
import functools
import math

import jax
import jax.numpy as jnp
from jax.experimental import pallas as pl
from jax.experimental.pallas import tpu as pltpu

_VMEM_LIMIT = 48 * 1024 * 1024           # safe on v5e/v6e (128 MiB) and v7x (64 MiB)
_RESIDENT_S_MAX_BYTES = 8 * 1024 * 1024  # keep full support matrix in VMEM below this


# ----------------------------------------------------------------------------
# Small helpers (padding / tile selection)
# ----------------------------------------------------------------------------
def _round_up(v, m):
    return (v + m - 1) // m * m


def _pad2(a, rows, cols):
    return jnp.pad(a, ((0, rows - a.shape[0]), (0, cols - a.shape[1])))


def _fit_rows(a, rows):
    """Re-pad / slice the row dim (rows beyond the real N are zeros either way)."""
    if a.shape[0] == rows:
        return a
    if a.shape[0] > rows:
        return a[:rows]
    return jnp.pad(a, ((0, rows - a.shape[0]), (0, 0)))


def _largest_div_tile(total, cap):
    """Largest multiple of 128 that divides `total` (a multiple of 128), <= cap."""
    t = max(128, min(cap, total))
    t -= t % 128
    while total % t:
        t -= 128
    return t


def _pick_col_tile(n_128, desired):
    """Largest multiple-of-128 tile <= desired whose padding of n_128 wastes <=12.5%."""
    desired = max(128, min(desired, n_128))
    t = desired - desired % 128
    while t > 128:
        if _round_up(n_128, t) * 8 <= n_128 * 9:
            return t
        t -= 128
    return 128


def _pick_row_tile(n_128, desired):
    """Like _pick_col_tile but prefers an even number of row tiles (v7x: 2 TCs)."""
    desired = max(128, min(desired, n_128))
    desired -= desired % 128
    first_ok = None
    t = desired
    while t >= 128:
        n_pad = _round_up(n_128, t)
        if n_pad * 8 <= n_128 * 9:            # <= 12.5% padding waste
            if first_ok is None:
                first_ok = t
            if (n_pad // t) % 2 == 0:         # even tile count -> balanced megacore
                return t
        if first_ok is not None and t <= max(128, desired // 2):
            break
        t -= 128
    return first_ok if first_ok is not None else 128


# ----------------------------------------------------------------------------
# Kernel 1: support = x @ W  (row tiles x k-grid over input features)
# ----------------------------------------------------------------------------
def _feature_transform_kernel(x_ref, w_ref, o_ref, acc_ref):
    k = pl.program_id(1)
    prod = jnp.dot(x_ref[...], w_ref[...], preferred_element_type=jnp.float32)

    @pl.when(k == 0)
    def _():
        acc_ref[...] = prod

    @pl.when(k != 0)
    def _():
        acc_ref[...] += prod

    @pl.when(k == pl.num_programs(1) - 1)
    def _():
        o_ref[...] = acc_ref[...].astype(o_ref.dtype)


def _feature_transform(x, w, *, out_dtype):
    n_rows, f_in = x.shape
    f_out = w.shape[1]

    tm = _largest_div_tile(n_rows, 1024)
    tk = _largest_div_tile(f_in, 2048)

    def vmem_need(tm_, tk_):
        return (2 * tm_ * tk_ * x.dtype.itemsize            # x tile (double buffered)
                + 2 * tk_ * f_out * w.dtype.itemsize        # w tile
                + 2 * tm_ * f_out * jnp.dtype(out_dtype).itemsize   # out tile
                + tm_ * f_out * 4)                           # f32 accumulator

    budget = 24 * 1024 * 1024                                # guard wide-feature inputs
    while vmem_need(tm, tk) > budget and tk > 128:
        tk = _largest_div_tile(f_in, tk - 128)
    while vmem_need(tm, tk) > budget and tm > 128:
        tm = _largest_div_tile(n_rows, tm - 128)

    grid = (n_rows // tm, f_in // tk)
    flops = 2 * n_rows * f_in * f_out
    bytes_accessed = (x.size * x.dtype.itemsize
                      + grid[0] * w.size * w.dtype.itemsize
                      + n_rows * f_out * jnp.dtype(out_dtype).itemsize)

    return pl.pallas_call(
        _feature_transform_kernel,
        out_shape=jax.ShapeDtypeStruct((n_rows, f_out), out_dtype),
        grid_spec=pltpu.PrefetchScalarGridSpec(
            num_scalar_prefetch=0,
            grid=grid,
            in_specs=[
                pl.BlockSpec((tm, tk), lambda i, k: (i, k)),
                pl.BlockSpec((tk, f_out), lambda i, k: (k, 0)),
            ],
            out_specs=pl.BlockSpec((tm, f_out), lambda i, k: (i, 0)),
            scratch_shapes=[pltpu.VMEM((tm, f_out), jnp.float32)],
        ),
        compiler_params=pltpu.CompilerParams(
            dimension_semantics=("parallel", "arbitrary"),
            vmem_limit_bytes=_VMEM_LIMIT,
        ),
        cost_estimate=pl.CostEstimate(
            flops=flops, transcendentals=0, bytes_accessed=bytes_accessed),
    )(x, w)


# ----------------------------------------------------------------------------
# Kernel 2: tiled adjacency matmul.
#   fused variant :  o = relu(adj @ s) @ W   (layer-1 ReLU + W2 epilogue)
#   plain variant :  o = relu(adj @ s)       (layer-2; accumulates in o_ref)
# The support operand s is VMEM-resident when small (constant index map).
# ----------------------------------------------------------------------------
def _adj_relu_matmul_kernel(tk, resident, adj_ref, s_ref, w_ref, o_ref, acc_ref):
    k = pl.program_id(1)
    if resident:
        s_blk = s_ref[pl.ds(pl.multiple_of(k * tk, tk), tk), :]
    else:
        s_blk = s_ref[...]
    prod = jnp.dot(adj_ref[...], s_blk, preferred_element_type=jnp.float32)

    @pl.when(k == 0)
    def _():
        acc_ref[...] = prod

    @pl.when(k != 0)
    def _():
        acc_ref[...] += prod

    @pl.when(k == pl.num_programs(1) - 1)
    def _():
        x2 = jnp.maximum(acc_ref[...], 0.0)                  # ReLU of layer-1 out
        o_ref[...] = jnp.dot(                                # fused  x2 @ W2
            x2.astype(w_ref.dtype), w_ref[...],
            preferred_element_type=jnp.float32).astype(o_ref.dtype)


def _adj_relu_kernel(tk, resident, adj_ref, s_ref, o_ref):
    k = pl.program_id(1)
    if resident:
        s_blk = s_ref[pl.ds(pl.multiple_of(k * tk, tk), tk), :]
    else:
        s_blk = s_ref[...]
    prod = jnp.dot(adj_ref[...], s_blk, preferred_element_type=jnp.float32)

    @pl.when(k == 0)
    def _():
        o_ref[...] = prod                                    # o_ref (f32) is the acc

    @pl.when(k != 0)
    def _():
        o_ref[...] += prod

    @pl.when(k == pl.num_programs(1) - 1)
    def _():
        o_ref[...] = jnp.maximum(o_ref[...], 0.0)


def _adj_layer(adj, s, w, *, tm, tk, out_dtype):
    """relu(adj @ s) [optionally followed by @ w], tiled over (rows, k)."""
    n_m, n_k = adj.shape
    f_mid = s.shape[1]
    f_out = w.shape[1] if w is not None else f_mid
    assert n_m % tm == 0 and n_k % tk == 0 and s.shape[0] == n_k
    if w is None:
        assert jnp.dtype(out_dtype) == jnp.float32  # o_ref doubles as the accumulator
    grid = (n_m // tm, n_k // tk)

    s_bytes = s.size * s.dtype.itemsize
    resident = s_bytes <= _RESIDENT_S_MAX_BYTES
    if resident:
        # Whole support matrix resident in VMEM: fetched once, never re-streamed.
        s_spec = pl.BlockSpec((n_k, f_mid), lambda i, k: (0, 0))
        s_reads = 1
    else:
        s_spec = pl.BlockSpec((tk, f_mid), lambda i, k: (k, 0))
        s_reads = grid[0]                    # re-streamed once per row tile

    in_specs = [pl.BlockSpec((tm, tk), lambda i, k: (i, k)), s_spec]
    operands = [adj, s]
    scratch = []
    if w is not None:
        in_specs.append(pl.BlockSpec((f_mid, f_out), lambda i, k: (0, 0)))
        operands.append(w)
        kernel = functools.partial(_adj_relu_matmul_kernel, tk, resident)
        scratch = [pltpu.VMEM((tm, f_mid), jnp.float32)]
    else:
        kernel = functools.partial(_adj_relu_kernel, tk, resident)

    flops = 2 * n_m * n_k * f_mid + (2 * n_m * f_mid * f_out if w is not None else 0)
    bytes_accessed = (adj.size * adj.dtype.itemsize
                      + s_reads * s_bytes
                      + (w.size * w.dtype.itemsize if w is not None else 0)
                      + n_m * f_out * jnp.dtype(out_dtype).itemsize)

    return pl.pallas_call(
        kernel,
        out_shape=jax.ShapeDtypeStruct((n_m, f_out), out_dtype),
        grid_spec=pltpu.PrefetchScalarGridSpec(
            num_scalar_prefetch=0,
            grid=grid,
            in_specs=in_specs,
            out_specs=pl.BlockSpec((tm, f_out), lambda i, k: (i, 0)),
            scratch_shapes=scratch,
        ),
        compiler_params=pltpu.CompilerParams(
            dimension_semantics=("parallel", "arbitrary"),
            vmem_limit_bytes=_VMEM_LIMIT,
        ),
        cost_estimate=pl.CostEstimate(
            flops=flops, transcendentals=0, bytes_accessed=bytes_accessed),
    )(*operands)


# ----------------------------------------------------------------------------
# Parameters & forward pass
# ----------------------------------------------------------------------------
def init_gcn_params(key, in_dim, hid_dim, out_dim):
    """Matches GraphConvolution.reset_parameters: W ~ U(-stdv, stdv),
    stdv = 1/sqrt(out_features).  The bias parameter exists on the module but
    is never added in forward, so it is not materialized here."""
    k1, k2 = jax.random.split(key)
    stdv1 = 1.0 / math.sqrt(hid_dim)
    stdv2 = 1.0 / math.sqrt(out_dim)
    w1 = jax.random.uniform(k1, (in_dim, hid_dim), jnp.float32, -stdv1, stdv1)
    w2 = jax.random.uniform(k2, (hid_dim, out_dim), jnp.float32, -stdv2, stdv2)
    return w1, w2


@functools.partial(
    jax.jit,
    static_argnames=("dropout", "training", "tm", "tk", "compute_dtype"))
def gcn_forward(x, adj, w1, w2, *, dropout=0.5, training=False,
                tm=1024, tk=2048, compute_dtype=jnp.bfloat16):
    """GCN.forward, eval mode: relu(adj @ (relu(adj @ (x@W1)) @ W2))."""
    del dropout, training
    # TODO(synk): training-mode dropout and the rdp/rdp2/f/final_conv_acts
    # bookkeeping (used only by the custom backward / Grad-CAM hook) are not
    # implemented; they do not affect the eval-mode forward output.
    n, f_in = x.shape
    hid = w1.shape[1]
    out_dim = w2.shape[1]

    f_in_p = _round_up(f_in, 128)
    hid_p = _round_up(hid, 128)
    out_p = _round_up(out_dim, 128)
    n_128 = _round_up(n, 128)

    # Tile selection: lane-width multiples, <=12.5% padding waste per axis,
    # >=2 (preferably even) row tiles where possible for v7x megacore, and
    # VMEM-aware caps for very wide hidden dims.
    max_tm_vmem = max(256, (4 * 1024 * 1024) // (hid_p * 4) // 128 * 128)
    max_tk_vmem = max(256, (4 * 1024 * 1024) // (hid_p * 2) // 128 * 128)
    tm_desired = min(tm, n_128, max_tm_vmem)
    if n_128 >= 256:
        tm_desired = min(tm_desired, _round_up(n_128 // 2, 128))
    tm = _pick_row_tile(n_128, tm_desired)
    tk = _pick_col_tile(n_128, min(tk, n_128, max_tk_vmem))

    # Independent row/column padding of the N^2 adjacency (no lcm blow-up).
    n_m = _round_up(n, tm)   # adjacency rows / layer-output rows
    n_k = _round_up(n, tk)   # adjacency cols / support rows

    cd = jnp.dtype(compute_dtype)
    adj_p = _pad2(adj, n_m, n_k).astype(cd)
    x_p = _pad2(x, n_k, f_in_p).astype(cd)
    w1_p = _pad2(w1, f_in_p, hid_p).astype(cd)
    w2_p = _pad2(w2, hid_p, out_p).astype(cd)

    # support1 = x @ W1   (hoisted out of the adjacency contraction loop)
    s1 = _feature_transform(x_p, w1_p, out_dtype=cd)
    # support2 = relu(adj @ support1) @ W2   (ReLU + W2 fused into the epilogue;
    # the wide (N, HID) intermediate never leaves VMEM)
    s2 = _adj_layer(adj_p, s1, w2_p, tm=tm, tk=tk, out_dtype=cd)
    # out = relu(adj @ support2)   (accumulates directly into the f32 output)
    out = _adj_layer(adj_p, _fit_rows(s2, n_k), None, tm=tm, tk=tk,
                     out_dtype=jnp.float32)
    return out[:n, :out_dim]


# ----------------------------------------------------------------------------
# Demo / self-check
# ----------------------------------------------------------------------------
def _reference_forward(x, adj, w1, w2):
    hp = jax.lax.Precision.HIGHEST
    s1 = jnp.dot(x, w1, precision=hp)
    x2 = jnp.maximum(jnp.dot(adj, s1, precision=hp), 0.0)
    s2 = jnp.dot(x2, w2, precision=hp)
    return jnp.maximum(jnp.dot(adj, s2, precision=hp), 0.0)


def _make_inputs(key, n, in_dim):
    k_x, k_adj = jax.random.split(key)
    x = jax.random.normal(k_x, (n, in_dim), jnp.float32)
    # dense, symmetric, row-normalized adjacency with self loops
    a = jax.random.uniform(k_adj, (n, n), jnp.float32)
    adj = (a + a.T) * 0.5 + jnp.eye(n, dtype=jnp.float32)
    adj = adj / jnp.sum(adj, axis=1, keepdims=True)
    return x, adj


if __name__ == "__main__":
    key = jax.random.PRNGKey(0)
    k_in, k_p, k_in2, k_p2 = jax.random.split(key, 4)

    # Case 1: small aligned graph.
    N, IN_DIM, HID_DIM, OUT_DIM = 64, 16, 32, 7
    x, adj = _make_inputs(k_in, N, IN_DIM)
    w1, w2 = init_gcn_params(k_p, IN_DIM, HID_DIM, OUT_DIM)
    out = jax.block_until_ready(gcn_forward(x, adj, w1, w2))
    ref = _reference_forward(x, adj, w1, w2)
    assert out.shape == (N, OUT_DIM)
    err = float(jnp.max(jnp.abs(out - ref)))
    assert bool(jnp.allclose(out, ref, atol=2e-2, rtol=2e-2)), (
        f"case1 mismatch vs f32 reference, max abs err = {err}")

    # Case 2: awkward (non-multiple-of-128) size with small tiles to exercise
    # the multi-step contraction grid, padding, and resident-support slicing.
    N2, IN2, HID2, OUT2 = 300, 20, 48, 7
    x2, adj2 = _make_inputs(k_in2, N2, IN2)
    w1b, w2b = init_gcn_params(k_p2, IN2, HID2, OUT2)
    out2 = jax.block_until_ready(gcn_forward(x2, adj2, w1b, w2b, tm=128, tk=128))
    ref2 = _reference_forward(x2, adj2, w1b, w2b)
    assert out2.shape == (N2, OUT2)
    err2 = float(jnp.max(jnp.abs(out2 - ref2)))
    assert bool(jnp.allclose(out2, ref2, atol=2e-2, rtol=2e-2)), (
        f"case2 mismatch vs f32 reference, max abs err = {err2}")

    print("KERNEL_OK")
</pallas_src>

<mosaic_0001>
module attributes {stable_mosaic.version = 11 : i64} {
  func.func @_feature_transform_kernel(%arg0: i32, %arg1: i32, %arg2: memref<128x128xbf16, #tpu.memory_space<vmem>>, %arg3: memref<128x128xbf16, #tpu.memory_space<vmem>>, %arg4: memref<128x128xbf16, #tpu.memory_space<vmem>>, %arg5: memref<128x128xf32, #tpu.memory_space<vmem>>) attributes {dimension_semantics = [#tpu.dimension_semantics<parallel>, #tpu.dimension_semantics<arbitrary>], iteration_bounds = array<i64: 1, 1>, scalar_prefetch = 0 : i64, scratch_operands = 1 : i64, tpu.core_type = #tpu.core_type<tc>, window_params = [{transform_indices = @transform_0, window_bounds = array<i64: 128, 128>}, {transform_indices = @transform_1, window_bounds = array<i64: 128, 128>}, {transform_indices = @transform_2, window_bounds = array<i64: 128, 128>}]} {
    %c0 = arith.constant 0 : index
    %c0_0 = arith.constant 0 : index
    %0 = vector.load %arg2[%c0, %c0_0] : memref<128x128xbf16, #tpu.memory_space<vmem>>, vector<128x128xbf16>
    %c0_1 = arith.constant 0 : index
    %c0_2 = arith.constant 0 : index
    %1 = vector.load %arg3[%c0_1, %c0_2] : memref<128x128xbf16, #tpu.memory_space<vmem>>, vector<128x128xbf16>
    %cst = arith.constant dense<0.000000e+00> : vector<128x128xf32>
    %2 = tpu.matmul %0, %1, %cst {dimension_numbers = #tpu.dot_dimension_numbers<[1], [0], [0], [1], [0, 0, 1, 1], [], []>} : vector<128x128xbf16>, vector<128x128xbf16>, vector<128x128xf32> -> vector<128x128xf32>
    %c0_i32 = arith.constant 0 : i32
    %3 = arith.cmpi eq, %arg1, %c0_i32 : i32
    %4 = arith.extui %3 : i1 to i32
    %c0_i32_3 = arith.constant 0 : i32
    %5 = arith.cmpi ne, %4, %c0_i32_3 : i32
    scf.if %5 {
      %c0_8 = arith.constant 0 : index
      %c0_9 = arith.constant 0 : index
      %12 = vector.load %arg5[%c0_8, %c0_9] : memref<128x128xf32, #tpu.memory_space<vmem>>, vector<128x128xf32>
      tpu.vector_store %arg5[%c0_8, %c0_9], %2 {strides = array<i32>} : memref<128x128xf32, #tpu.memory_space<vmem>>, vector<128x128xf32>,
    } else {
    }
    %c0_i32_4 = arith.constant 0 : i32
    %6 = arith.cmpi ne, %arg1, %c0_i32_4 : i32
    %7 = arith.extui %6 : i1 to i32
    %c0_i32_5 = arith.constant 0 : i32
    %8 = arith.cmpi ne, %7, %c0_i32_5 : i32
    scf.if %8 {
      %c0_8 = arith.constant 0 : index
      %c0_9 = arith.constant 0 : index
      %12 = vector.load %arg5[%c0_8, %c0_9] : memref<128x128xf32, #tpu.memory_space<vmem>>, vector<128x128xf32>
      %13 = arith.addf %12, %2 : vector<128x128xf32>
      %c0_10 = arith.constant 0 : index
      %c0_11 = arith.constant 0 : index
      %14 = vector.load %arg5[%c0_10, %c0_11] : memref<128x128xf32, #tpu.memory_space<vmem>>, vector<128x128xf32>
      tpu.vector_store %arg5[%c0_10, %c0_11], %13 {strides = array<i32>} : memref<128x128xf32, #tpu.memory_space<vmem>>, vector<128x128xf32>,
    } else {
    }
    %c0_i32_6 = arith.constant 0 : i32
    %9 = arith.cmpi eq, %arg1, %c0_i32_6 : i32
    %10 = arith.extui %9 : i1 to i32
    %c0_i32_7 = arith.constant 0 : i32
    %11 = arith.cmpi ne, %10, %c0_i32_7 : i32
    scf.if %11 {
      %c0_8 = arith.constant 0 : index
      %c0_9 = arith.constant 0 : index
      %12 = vector.load %arg5[%c0_8, %c0_9] : memref<128x128xf32, #tpu.memory_space<vmem>>, vector<128x128xf32>
      %13 = arith.truncf %12 : vector<128x128xf32> to vector<128x128xbf16>
      %c0_10 = arith.constant 0 : index
      %c0_11 = arith.constant 0 : index
      %14 = vector.load %arg4[%c0_10, %c0_11] : memref<128x128xbf16, #tpu.memory_space<vmem>>, vector<128x128xbf16>
      tpu.vector_store %arg4[%c0_10, %c0_11], %13 {strides = array<i32>} : memref<128x128xbf16, #tpu.memory_space<vmem>>, vector<128x128xbf16>,
    } else {
    }
    return
  }
  func.func @transform_0(%arg0: i32, %arg1: i32) -> (i32, i32) {
    %c0_i32 = arith.constant 0 : i32
    return %arg0, %arg1 : i32, i32
  }
  func.func @transform_1(%arg0: i32, %arg1: i32) -> (i32, i32) {
    %c0_i32 = arith.constant 0 : i32
    %c0_i32_0 = arith.constant 0 : i32
    return %arg1, %c0_i32 : i32, i32
  }
  func.func @transform_2(%arg0: i32, %arg1: i32) -> (i32, i32) {
    %c0_i32 = arith.constant 0 : i32
    %c0_i32_0 = arith.constant 0 : i32
    return %arg0, %c0_i32 : i32, i32
  }
}

module attributes {stable_mosaic.version = 11 : i64} {
  func.func @_adj_relu_matmul_kernel(%arg0: i32, %arg1: i32, %arg2: memref<128x128xbf16, #tpu.memory_space<vmem>>, %arg3: memref<128x128xbf16, #tpu.memory_space<vmem>>, %arg4: memref<128x128xbf16, #tpu.memory_space<vmem>>, %arg5: memref<128x128xbf16, #tpu.memory_space<vmem>>, %arg6: memref<128x128xf32, #tpu.memory_space<vmem>>) attributes {dimension_semantics = [#tpu.dimension_semantics<parallel>, #tpu.dimension_semantics<arbitrary>], iteration_bounds = array<i64: 1, 1>, scalar_prefetch = 0 : i64, scratch_operands = 1 : i64, tpu.core_type = #tpu.core_type<tc>, window_params = [{transform_indices = @transform_0, window_bounds = array<i64: 128, 128>}, {pipeline_mode = #tpu.pipeline_mode<synchronous>, transform_indices = @transform_1, window_bounds = array<i64: 128, 128>}, {pipeline_mode = #tpu.pipeline_mode<synchronous>, transform_indices = @transform_2, window_bounds = array<i64: 128, 128>}, {transform_indices = @transform_3, window_bounds = array<i64: 128, 128>}]} {
    %c128_i32 = arith.constant 128 : i32
    %0 = arith.muli %arg1, %c128_i32 : i32
    %1 = tpu.assume_multiple %0, 128 : i32
    %2 = arith.index_cast %1 : i32 to index
    %c0 = arith.constant 0 : index
    %3 = vector.load %arg3[%2, %c0] : memref<128x128xbf16, #tpu.memory_space<vmem>>, vector<128x128xbf16>
    %c0_0 = arith.constant 0 : index
    %c0_1 = arith.constant 0 : index
    %4 = vector.load %arg2[%c0_0, %c0_1] : memref<128x128xbf16, #tpu.memory_space<vmem>>, vector<128x128xbf16>
    %cst = arith.constant dense<0.000000e+00> : vector<128x128xf32>
    %5 = tpu.matmul %4, %3, %cst {dimension_numbers = #tpu.dot_dimension_numbers<[1], [0], [0], [1], [0, 0, 1, 1], [], []>} : vector<128x128xbf16>, vector<128x128xbf16>, vector<128x128xf32> -> vector<128x128xf32>
    %c0_i32 = arith.constant 0 : i32
    %6 = arith.cmpi eq, %arg1, %c0_i32 : i32
    %7 = arith.extui %6 : i1 to i32
    %c0_i32_2 = arith.constant 0 : i32
    %8 = arith.cmpi ne, %7, %c0_i32_2 : i32
    scf.if %8 {
      %c0_7 = arith.constant 0 : index
      %c0_8 = arith.constant 0 : index
      %15 = vector.load %arg6[%c0_7, %c0_8] : memref<128x128xf32, #tpu.memory_space<vmem>>, vector<128x128xf32>
      tpu.vector_store %arg6[%c0_7, %c0_8], %5 {strides = array<i32>} : memref<128x128xf32, #tpu.memory_space<vmem>>, vector<128x128xf32>,
    } else {
    }
    %c0_i32_3 = arith.constant 0 : i32
    %9 = arith.cmpi ne, %arg1, %c0_i32_3 : i32
    %10 = arith.extui %9 : i1 to i32
    %c0_i32_4 = arith.constant 0 : i32
    %11 = arith.cmpi ne, %10, %c0_i32_4 : i32
    scf.if %11 {
      %c0_7 = arith.constant 0 : index
      %c0_8 = arith.constant 0 : index
      %15 = vector.load %arg6[%c0_7, %c0_8] : memref<128x128xf32, #tpu.memory_space<vmem>>, vector<128x128xf32>
      %16 = arith.addf %15, %5 : vector<128x128xf32>
      %c0_9 = arith.constant 0 : index
      %c0_10 = arith.constant 0 : index
      %17 = vector.load %arg6[%c0_9, %c0_10] : memref<128x128xf32, #tpu.memory_space<vmem>>, vector<128x128xf32>
      tpu.vector_store %arg6[%c0_9, %c0_10], %16 {strides = array<i32>} : memref<128x128xf32, #tpu.memory_space<vmem>>, vector<128x128xf32>,
    } else {
    }
    %c0_i32_5 = arith.constant 0 : i32
    %12 = arith.cmpi eq, %arg1, %c0_i32_5 : i32
    %13 = arith.extui %12 : i1 to i32
    %c0_i32_6 = arith.constant 0 : i32
    %14 = arith.cmpi ne, %13, %c0_i32_6 : i32
    scf.if %14 {
      %c0_7 = arith.constant 0 : index
      %c0_8 = arith.constant 0 : index
      %15 = vector.load %arg6[%c0_7, %c0_8] : memref<128x128xf32, #tpu.memory_space<vmem>>, vector<128x128xf32>
      %cst_9 = arith.constant 0.000000e+00 : f32
      %16 = vector.broadcast %cst_9 : f32 to vector<128x128xf32>
      %17 = arith.maximumf %15, %16 : vector<128x128xf32>
      %18 = arith.truncf %17 : vector<128x128xf32> to vector<128x128xbf16>
      %c0_10 = arith.constant 0 : index
      %c0_11 = arith.constant 0 : index
      %19 = vector.load %arg4[%c0_10, %c0_11] : memref<128x128xbf16, #tpu.memory_space<vmem>>, vector<128x128xbf16>
      %cst_12 = arith.constant dense<0.000000e+00> : vector<128x128xf32>
      %20 = tpu.matmul %18, %19, %cst_12 {dimension_numbers = #tpu.dot_dimension_numbers<[1], [0], [0], [1], [0, 0, 1, 1], [], []>} : vector<128x128xbf16>, vector<128x128xbf16>, vector<128x128xf32> -> vector<128x128xf32>
      %21 = arith.truncf %20 : vector<128x128xf32> to vector<128x128xbf16>
      %c0_13 = arith.constant 0 : index
      %c0_14 = arith.constant 0 : index
      %22 = vector.load %arg5[%c0_13, %c0_14] : memref<128x128xbf16, #tpu.memory_space<vmem>>, vector<128x128xbf16>
      tpu.vector_store %arg5[%c0_13, %c0_14], %21 {strides = array<i32>} : memref<128x128xbf16, #tpu.memory_space<vmem>>, vector<128x128xbf16>,
    } else {
    }
    return
  }
  func.func @transform_0(%arg0: i32, %arg1: i32) -> (i32, i32) {
    %c0_i32 = arith.constant 0 : i32
    return %arg0, %arg1 : i32, i32
  }
  func.func @transform_1(%arg0: i32, %arg1: i32) -> (i32, i32) {
    %c0_i32 = arith.constant 0 : i32
    %c0_i32_0 = arith.constant 0 : i32
    %c0_i32_1 = arith.constant 0 : i32
    return %c0_i32, %c0_i32_0 : i32, i32
  }
  func.func @transform_2(%arg0: i32, %arg1: i32) -> (i32, i32) {
    %c0_i32 = arith.constant 0 : i32
    %c0_i32_0 = arith.constant 0 : i32
    %c0_i32_1 = arith.constant 0 : i32
    return %c0_i32, %c0_i32_0 : i32, i32
  }
  func.func @transform_3(%arg0: i32, %arg1: i32) -> (i32, i32) {
    %c0_i32 = arith.constant 0 : i32
    %c0_i32_0 = arith.constant 0 : i32
    return %arg0, %c0_i32 : i32, i32
  }
}

module attributes {stable_mosaic.version = 11 : i64} {
  func.func @_adj_relu_kernel(%arg0: i32, %arg1: i32, %arg2: memref<128x128xbf16, #tpu.memory_space<vmem>>, %arg3: memref<128x128xbf16, #tpu.memory_space<vmem>>, %arg4: memref<128x128xf32, #tpu.memory_space<vmem>>) attributes {dimension_semantics = [#tpu.dimension_semantics<parallel>, #tpu.dimension_semantics<arbitrary>], iteration_bounds = array<i64: 1, 1>, scalar_prefetch = 0 : i64, scratch_operands = 0 : i64, tpu.core_type = #tpu.core_type<tc>, window_params = [{transform_indices = @transform_0, window_bounds = array<i64: 128, 128>}, {pipeline_mode = #tpu.pipeline_mode<synchronous>, transform_indices = @transform_1, window_bounds = array<i64: 128, 128>}, {transform_indices = @transform_2, window_bounds = array<i64: 128, 128>}]} {
    %c128_i32 = arith.constant 128 : i32
    %0 = arith.muli %arg1, %c128_i32 : i32
    %1 = tpu.assume_multiple %0, 128 : i32
    %2 = arith.index_cast %1 : i32 to index
    %c0 = arith.constant 0 : index
    %3 = vector.load %arg3[%2, %c0] : memref<128x128xbf16, #tpu.memory_space<vmem>>, vector<128x128xbf16>
    %c0_0 = arith.constant 0 : index
    %c0_1 = arith.constant 0 : index
    %4 = vector.load %arg2[%c0_0, %c0_1] : memref<128x128xbf16, #tpu.memory_space<vmem>>, vector<128x128xbf16>
    %cst = arith.constant dense<0.000000e+00> : vector<128x128xf32>
    %5 = tpu.matmul %4, %3, %cst {dimension_numbers = #tpu.dot_dimension_numbers<[1], [0], [0], [1], [0, 0, 1, 1], [], []>} : vector<128x128xbf16>, vector<128x128xbf16>, vector<128x128xf32> -> vector<128x128xf32>
    %c0_i32 = arith.constant 0 : i32
    %6 = arith.cmpi eq, %arg1, %c0_i32 : i32
    %7 = arith.extui %6 : i1 to i32
    %c0_i32_2 = arith.constant 0 : i32
    %8 = arith.cmpi ne, %7, %c0_i32_2 : i32
    scf.if %8 {
      %c0_7 = arith.constant 0 : index
      %c0_8 = arith.constant 0 : index
      %15 = vector.load %arg4[%c0_7, %c0_8] : memref<128x128xf32, #tpu.memory_space<vmem>>, vector<128x128xf32>
      tpu.vector_store %arg4[%c0_7, %c0_8], %5 {strides = array<i32>} : memref<128x128xf32, #tpu.memory_space<vmem>>, vector<128x128xf32>,
    } else {
    }
    %c0_i32_3 = arith.constant 0 : i32
    %9 = arith.cmpi ne, %arg1, %c0_i32_3 : i32
    %10 = arith.extui %9 : i1 to i32
    %c0_i32_4 = arith.constant 0 : i32
    %11 = arith.cmpi ne, %10, %c0_i32_4 : i32
    scf.if %11 {
      %c0_7 = arith.constant 0 : index
      %c0_8 = arith.constant 0 : index
      %15 = vector.load %arg4[%c0_7, %c0_8] : memref<128x128xf32, #tpu.memory_space<vmem>>, vector<128x128xf32>
      %16 = arith.addf %15, %5 : vector<128x128xf32>
      %c0_9 = arith.constant 0 : index
      %c0_10 = arith.constant 0 : index
      %17 = vector.load %arg4[%c0_9, %c0_10] : memref<128x128xf32, #tpu.memory_space<vmem>>, vector<128x128xf32>
      tpu.vector_store %arg4[%c0_9, %c0_10], %16 {strides = array<i32>} : memref<128x128xf32, #tpu.memory_space<vmem>>, vector<128x128xf32>,
    } else {
    }
    %c0_i32_5 = arith.constant 0 : i32
    %12 = arith.cmpi eq, %arg1, %c0_i32_5 : i32
    %13 = arith.extui %12 : i1 to i32
    %c0_i32_6 = arith.constant 0 : i32
    %14 = arith.cmpi ne, %13, %c0_i32_6 : i32
    scf.if %14 {
      %c0_7 = arith.constant 0 : index
      %c0_8 = arith.constant 0 : index
      %15 = vector.load %arg4[%c0_7, %c0_8] : memref<128x128xf32, #tpu.memory_space<vmem>>, vector<128x128xf32>
      %cst_9 = arith.constant 0.000000e+00 : f32
      %16 = vector.broadcast %cst_9 : f32 to vector<128x128xf32>
      %17 = arith.maximumf %15, %16 : vector<128x128xf32>
      %c0_10 = arith.constant 0 : index
      %c0_11 = arith.constant 0 : index
      %18 = vector.load %arg4[%c0_10, %c0_11] : memref<128x128xf32, #tpu.memory_space<vmem>>, vector<128x128xf32>
      tpu.vector_store %arg4[%c0_10, %c0_11], %17 {strides = array<i32>} : memref<128x128xf32, #tpu.memory_space<vmem>>, vector<128x128xf32>,
    } else {
    }
    return
  }
  func.func @transform_0(%arg0: i32, %arg1: i32) -> (i32, i32) {
    %c0_i32 = arith.constant 0 : i32
    return %arg0, %arg1 : i32, i32
  }
  func.func @transform_1(%arg0: i32, %arg1: i32) -> (i32, i32) {
    %c0_i32 = arith.constant 0 : i32
    %c0_i32_0 = arith.constant 0 : i32
    %c0_i32_1 = arith.constant 0 : i32
    return %c0_i32, %c0_i32_0 : i32, i32
  }
  func.func @transform_2(%arg0: i32, %arg1: i32) -> (i32, i32) {
    %c0_i32 = arith.constant 0 : i32
    %c0_i32_0 = arith.constant 0 : i32
    return %arg0, %c0_i32 : i32, i32
  }
}

</mosaic_0001>

<llo_original>
// kernel: gcn_forward.5
$region0: #{gcn_forward.5}
  #allocation0 [shape = 'u32[]', space=smem, size = 0x4, offset = 0x4, fixed_abs, tag = 'smem constant byte address 0x4 - core index']
  #allocation1 [shape = 'u32[144,128]{1,0:T(1,128)}', space=vmem, size = 0x12000, scoped, tag = 'internal scratch']
  %s0 = inlined_call_operand.vmem [shape: bf16[128,128], index: 0, kind: input, shape index: {}]
  %s1 = inlined_call_operand.vmem [shape: bf16[128,128], index: 1, kind: input, shape index: {}]
  %s2 = inlined_call_operand.vmem [shape: f32[128,128], index: 2, kind: output, shape index: {}]
  %s3 = sld [smem:[#allocation0]]
  $region30: #{gcn_forward.5} parent=0
    _
  %s5 = ssub.s32 1, %s3
  %s6 = scalar_select 0, %s5, %s3
  // Predicated region
  $region2: #{gcn_forward.5} parent=0 // pred_check
    _
  $region3: #{gcn_forward.5} parent=0 // pred_check_branch
    %8 = sbr.rel (0) target = $region5
  $region4: #{gcn_forward.5} parent=0 // pred_region
    _
  $region5: #{gcn_forward.5} parent=0 // pred_fallthru
    _
  // Predicated region
  $region6: #{gcn_forward.5} parent=0 // pred_check
    _
  $region7: #{gcn_forward.5} parent=0 // pred_check_branch
    %10 = sbr.rel (0) target = $region9
  $region8: #{gcn_forward.5} parent=0 // pred_region
    _
  $region9: #{gcn_forward.5} parent=0 // pred_fallthru
    _
  %s12 = smul.u32 0, 128
  %s13 = sshra.s32 %s12, 3
  %s14 = sand.u32 %s12, 7
  %s15 = smul.addr %s13, 4
  %s16 = scalar_lea.vmem %s1, %s15
  %v17 = vld [vmem:[%s16] sm:$0xf]
  %v18 = vld [vmem:[%s16 + $0x4] sm:$0xf]
  %v19 = vld [vmem:[%s16 + $0x8] sm:$0xf]
  %v20 = vld [vmem:[%s16 + $0xc] sm:$0xf]
  %v21 = vld [vmem:[%s16 + $0x10] sm:$0xf]
  %v22 = vld [vmem:[%s16 + $0x14] sm:$0xf]
  %v23 = vld [vmem:[%s16 + $0x18] sm:$0xf]
  %v24 = vld [vmem:[%s16 + $0x1c] sm:$0xf]
  %v25 = vld [vmem:[%s16 + $0x20] sm:$0xf]
  %v26 = vld [vmem:[%s16 + $0x24] sm:$0xf]
  %v27 = vld [vmem:[%s16 + $0x28] sm:$0xf]
  %v28 = vld [vmem:[%s16 + $0x2c] sm:$0xf]
  %v29 = vld [vmem:[%s16 + $0x30] sm:$0xf]
  %v30 = vld [vmem:[%s16 + $0x34] sm:$0xf]
  %v31 = vld [vmem:[%s16 + $0x38] sm:$0xf]
  %v32 = vld [vmem:[%s16 + $0x3c] sm:$0xf]
  %v33 = vld [vmem:[%s0] sm:$0xf]
  %v34 = vld [vmem:[%s0 + $0x4] sm:$0xf]
  %v35 = vld [vmem:[%s0 + $0x8] sm:$0xf]
  %v36 = vld [vmem:[%s0 + $0xc] sm:$0xf]
  %v37 = vld [vmem:[%s0 + $0x10] sm:$0xf]
  %v38 = vld [vmem:[%s0 + $0x14] sm:$0xf]
  %v39 = vld [vmem:[%s0 + $0x18] sm:$0xf]
  %v40 = vld [vmem:[%s0 + $0x1c] sm:$0xf]
  %v41 = vld [vmem:[%s0 + $0x20] sm:$0xf]
  %v42 = vld [vmem:[%s0 + $0x24] sm:$0xf]
  %v43 = vld [vmem:[%s0 + $0x28] sm:$0xf]
  %v44 = vld [vmem:[%s0 + $0x2c] sm:$0xf]
  %v45 = vld [vmem:[%s0 + $0x30] sm:$0xf]
  %v46 = vld [vmem:[%s0 + $0x34] sm:$0xf]
  %v47 = vld [vmem:[%s0 + $0x38] sm:$0xf]
  %v48 = vld [vmem:[%s0 + $0x3c] sm:$0xf]
  %v65 = vunpack.c.l.b16 %v33
  %v66 = vunpack.c.l.b16 %v34
  %v67 = vunpack.c.l.b16 %v35
  %v68 = vunpack.c.l.b16 %v36
  %v69 = vunpack.c.l.b16 %v37
  %v70 = vunpack.c.l.b16 %v38
  %v71 = vunpack.c.l.b16 %v39
  %v72 = vunpack.c.l.b16 %v40
  %v73 = vunpack.c.l.b16 %v41
  %v74 = vunpack.c.l.b16 %v42
  %v75 = vunpack.c.l.b16 %v43
  %v76 = vunpack.c.l.b16 %v44
  %v77 = vunpack.c.l.b16 %v45
  %v78 = vunpack.c.l.b16 %v46
  %v79 = vunpack.c.l.b16 %v47
  %v80 = vunpack.c.l.b16 %v48
  %v81 = vpack.c.b16 %v66, %v65
  %v82 = vpack.c.b16 %v68, %v67
  %v83 = vpack.c.b16 %v70, %v69
  %v84 = vpack.c.b16 %v72, %v71
  %v85 = vpack.c.b16 %v74, %v73
  %v86 = vpack.c.b16 %v76, %v75
  %v87 = vpack.c.b16 %v78, %v77
  %v88 = vpack.c.b16 %v80, %v79
  %v113 = vunpack.c.l.b16 %v17
  %v114 = vunpack.c.l.b16 %v18
  %v115 = vunpack.c.l.b16 %v19
  %v116 = vunpack.c.l.b16 %v20
  %v117 = vunpack.c.l.b16 %v21
  %v118 = vunpack.c.l.b16 %v22
  %v119 = vunpack.c.l.b16 %v23
  %v120 = vunpack.c.l.b16 %v24
  %v121 = vunpack.c.l.b16 %v25
  %v122 = vunpack.c.l.b16 %v26
  %v123 = vunpack.c.l.b16 %v27
  %v124 = vunpack.c.l.b16 %v28
  %v125 = vunpack.c.l.b16 %v29
  %v126 = vunpack.c.l.b16 %v30
  %v127 = vunpack.c.l.b16 %v31
  %v128 = vunpack.c.l.b16 %v32
  %v129 = vpack.c.b16 %v114, %v113
  %v130 = vpack.c.b16 %v116, %v115
  %v131 = vpack.c.b16 %v118, %v117
  %v132 = vpack.c.b16 %v120, %v119
  %v133 = vpack.c.b16 %v122, %v121
  %v134 = vpack.c.b16 %v124, %v123
  %v135 = vpack.c.b16 %v126, %v125
  %v136 = vpack.c.b16 %v128, %v127
  %145 = vmatprep.subr.bf16.mxu0 0
  %146 = vmatpush1.bf16.msra.mxu0 %v136
  %147 = vmatprep.subr.bf16.mxu0 0
  %148 = vmatpush1.bf16.msra.mxu0 %v135
  %149 = vmatprep.subr.bf16.mxu0 0
  %150 = vmatpush1.bf16.msra.mxu0 %v134
  %151 = vmatprep.subr.bf16.mxu0 0
  %152 = vmatpush1.bf16.msra.mxu0 %v133
  %153 = vmatprep.subr.bf16.mxu0 0
  %154 = vmatpush1.bf16.msra.mxu0 %v132
  %155 = vmatprep.subr.bf16.mxu0 0
  %156 = vmatpush1.bf16.msra.mxu0 %v131
  %157 = vmatprep.subr.bf16.mxu0 0
  %158 = vmatpush1.bf16.msra.mxu0 %v130
  %159 = vmatprep.subr.bf16.mxu0 0
  %160 = vmatpush1.bf16.msra.mxu0 %v129
  %161 = vmatprep.subr.bf16.mxu0 0
  %162 = vmatpush2.bf16.msra.mxu0 0
  %163 = vmatprep.subr.bf16.mxu0 0
  %164 = vmatpush2.bf16.msra.mxu0 0
  %165 = vmatprep.subr.bf16.mxu0 0
  %166 = vmatpush2.bf16.msra.mxu0 0
  %167 = vmatprep.subr.bf16.mxu0 0
  %168 = vmatpush2.bf16.msra.mxu0 0
  %169 = vmatprep.subr.bf16.mxu0 0
  %170 = vmatpush2.bf16.msra.mxu0 0
  %171 = vmatprep.subr.bf16.mxu0 0
  %172 = vmatpush2.bf16.msra.mxu0 0
  %173 = vmatprep.subr.bf16.mxu0 0
  %174 = vmatpush2.bf16.msra.mxu0 0
  %175 = vmatprep.subr.bf16.mxu0 0
  %176 = vmatpush2.bf16.msra.mxu0 0
  %177 = vmatprep.mubr.bf16.mxu0 0
  %178 = vmatmul.mubr.bf16.gmra.mxu0 %v81
  %v179 = vpop.f32.mrf.mxu0
  %v180 = vadd.f32 0.0, %v179
  %v181 = vpop.f32.mrf.mxu0
  %v182 = vpop.f32.mrf.mxu0
  %v183 = vadd.f32 0.0, %v182
  %v184 = vpop.f32.mrf.mxu0
  %185 = vmatprep.mubr.bf16.mxu0 0
  %186 = vmatmul.mubr.bf16.gmra.mxu0 %v82
  %v187 = vpop.f32.mrf.mxu0
  %v188 = vadd.f32 0.0, %v187
  %v189 = vpop.f32.mrf.mxu0
  %v190 = vpop.f32.mrf.mxu0
  %v191 = vadd.f32 0.0, %v190
  %v192 = vpop.f32.mrf.mxu0
  %193 = vmatprep.mubr.bf16.mxu0 0
  %194 = vmatmul.mubr.bf16.gmra.mxu0 %v83
  %v195 = vpop.f32.mrf.mxu0
  %v196 = vadd.f32 0.0, %v195
  %v197 = vpop.f32.mrf.mxu0
  %v198 = vpop.f32.mrf.mxu0
  %v199 = vadd.f32 0.0, %v198
  %v200 = vpop.f32.mrf.mxu0
  %201 = vmatprep.mubr.bf16.mxu0 0
  %202 = vmatmul.mubr.bf16.gmra.mxu0 %v84
  %v203 = vpop.f32.mrf.mxu0
  %v204 = vadd.f32 0.0, %v203
  %v205 = vpop.f32.mrf.mxu0
  %v206 = vpop.f32.mrf.mxu0
  %v207 = vadd.f32 0.0, %v206
  %v208 = vpop.f32.mrf.mxu0
  %209 = vmatprep.mubr.bf16.mxu0 0
  %210 = vmatmul.mubr.bf16.gmra.mxu0 %v85
  %v211 = vpop.f32.mrf.mxu0
  %v212 = vadd.f32 0.0, %v211
  %v213 = vpop.f32.mrf.mxu0
  %v214 = vpop.f32.mrf.mxu0
  %v215 = vadd.f32 0.0, %v214
  %v216 = vpop.f32.mrf.mxu0
  %217 = vmatprep.mubr.bf16.mxu0 0
  %218 = vmatmul.mubr.bf16.gmra.mxu0 %v86
  %v219 = vpop.f32.mrf.mxu0
  %v220 = vadd.f32 0.0, %v219
  %v221 = vpop.f32.mrf.mxu0
  %v222 = vpop.f32.mrf.mxu0
  %v223 = vadd.f32 0.0, %v222
  %v224 = vpop.f32.mrf.mxu0
  %225 = vmatprep.mubr.bf16.mxu0 0
  %226 = vmatmul.mubr.bf16.gmra.mxu0 %v87
  %v227 = vpop.f32.mrf.mxu0
  %v228 = vadd.f32 0.0, %v227
  %v229 = vpop.f32.mrf.mxu0
  %v230 = vpop.f32.mrf.mxu0
  %v231 = vadd.f32 0.0, %v230
  %v232 = vpop.f32.mrf.mxu0
  %233 = vmatprep.mubr.bf16.mxu0 0
  %234 = vmatmul.mubr.bf16.gmra.mxu0 %v88
  %v235 = vpop.f32.mrf.mxu0
  %v236 = vadd.f32 0.0, %v235
  %v237 = vpop.f32.mrf.mxu0
  %v238 = vpop.f32.mrf.mxu0
  %v239 = vadd.f32 0.0, %v238
  %v240 = vpop.f32.mrf.mxu0
  %241 = vdwg.mxu0
  %p242 = scmp.eq.s32.totalorder 0, 0
  // Predicated region
  $region10: #{gcn_forward.5} parent=0 // pred_check
    %p243 = pneg %p242
  $region11: #{gcn_forward.5} parent=0 // pred_check_branch
    %245 = sbr.rel (%p243) target = $region13
  $region12: #{gcn_forward.5} parent=0 // pred_region
    %246 = vst [vmem:[%s2] sm:$0xff] %v180
    %247 = vst [vmem:[%s2 + $0x8] sm:$0xff] %v183
    %248 = vst [vmem:[%s2 + $0x10] sm:$0xff] %v188
    %249 = vst [vmem:[%s2 + $0x18] sm:$0xff] %v191
    %250 = vst [vmem:[%s2 + $0x20] sm:$0xff] %v196
    %251 = vst [vmem:[%s2 + $0x28] sm:$0xff] %v199
    %252 = vst [vmem:[%s2 + $0x30] sm:$0xff] %v204
    %253 = vst [vmem:[%s2 + $0x38] sm:$0xff] %v207
    %254 = vst [vmem:[%s2 + $0x40] sm:$0xff] %v212
    %255 = vst [vmem:[%s2 + $0x48] sm:$0xff] %v215
    %256 = vst [vmem:[%s2 + $0x50] sm:$0xff] %v220
    %257 = vst [vmem:[%s2 + $0x58] sm:$0xff] %v223
    %258 = vst [vmem:[%s2 + $0x60] sm:$0xff] %v228
    %259 = vst [vmem:[%s2 + $0x68] sm:$0xff] %v231
    %260 = vst [vmem:[%s2 + $0x70] sm:$0xff] %v236
    %261 = vst [vmem:[%s2 + $0x78] sm:$0xff] %v239
  $region13: #{gcn_forward.5} parent=0 // pred_fallthru
    _
  %p262 = scmp.ne.s32.totalorder 0, 0
  // Predicated region
  $region14: #{gcn_forward.5} parent=0 // pred_check
    %p263 = pneg %p262
  $region15: #{gcn_forward.5} parent=0 // pred_check_branch
    %265 = sbr.rel (%p263) target = $region17
  $region16: #{gcn_forward.5} parent=0 // pred_region
    %v266 = vld [vmem:[%s2] sm:$0xff]
    %v267 = vld [vmem:[%s2 + $0x8] sm:$0xff]
    %v268 = vld [vmem:[%s2 + $0x10] sm:$0xff]
    %v269 = vld [vmem:[%s2 + $0x18] sm:$0xff]
    %v270 = vld [vmem:[%s2 + $0x20] sm:$0xff]
    %v271 = vld [vmem:[%s2 + $0x28] sm:$0xff]
    %v272 = vld [vmem:[%s2 + $0x30] sm:$0xff]
    %v273 = vld [vmem:[%s2 + $0x38] sm:$0xff]
    %v274 = vld [vmem:[%s2 + $0x40] sm:$0xff]
    %v275 = vld [vmem:[%s2 + $0x48] sm:$0xff]
    %v276 = vld [vmem:[%s2 + $0x50] sm:$0xff]
    %v277 = vld [vmem:[%s2 + $0x58] sm:$0xff]
    %v278 = vld [vmem:[%s2 + $0x60] sm:$0xff]
    %v279 = vld [vmem:[%s2 + $0x68] sm:$0xff]
    %v280 = vld [vmem:[%s2 + $0x70] sm:$0xff]
    %v281 = vld [vmem:[%s2 + $0x78] sm:$0xff]
    %v282 = vadd.f32 %v266, %v180
    %v283 = vadd.f32 %v267, %v183
    %v284 = vadd.f32 %v268, %v188
    %v285 = vadd.f32 %v269, %v191
    %v286 = vadd.f32 %v270, %v196
    %v287 = vadd.f32 %v271, %v199
    %v288 = vadd.f32 %v272, %v204
    %v289 = vadd.f32 %v273, %v207
    %v290 = vadd.f32 %v274, %v212
    %v291 = vadd.f32 %v275, %v215
    %v292 = vadd.f32 %v276, %v220
    %v293 = vadd.f32 %v277, %v223
    %v294 = vadd.f32 %v278, %v228
    %v295 = vadd.f32 %v279, %v231
    %v296 = vadd.f32 %v280, %v236
    %v297 = vadd.f32 %v281, %v239
    %298 = vst [vmem:[%s2] sm:$0xff] %v282
    %299 = vst [vmem:[%s2 + $0x8] sm:$0xff] %v283
    %300 = vst [vmem:[%s2 + $0x10] sm:$0xff] %v284
    %301 = vst [vmem:[%s2 + $0x18] sm:$0xff] %v285
    %302 = vst [vmem:[%s2 + $0x20] sm:$0xff] %v286
    %303 = vst [vmem:[%s2 + $0x28] sm:$0xff] %v287
    %304 = vst [vmem:[%s2 + $0x30] sm:$0xff] %v288
    %305 = vst [vmem:[%s2 + $0x38] sm:$0xff] %v289
    %306 = vst [vmem:[%s2 + $0x40] sm:$0xff] %v290
    %307 = vst [vmem:[%s2 + $0x48] sm:$0xff] %v291
    %308 = vst [vmem:[%s2 + $0x50] sm:$0xff] %v292
    %309 = vst [vmem:[%s2 + $0x58] sm:$0xff] %v293
    %310 = vst [vmem:[%s2 + $0x60] sm:$0xff] %v294
    %311 = vst [vmem:[%s2 + $0x68] sm:$0xff] %v295
    %312 = vst [vmem:[%s2 + $0x70] sm:$0xff] %v296
    %313 = vst [vmem:[%s2 + $0x78] sm:$0xff] %v297
  $region17: #{gcn_forward.5} parent=0 // pred_fallthru
    _
  // Predicated region
  $region18: #{gcn_forward.5} parent=0 // pred_check
    %p314 = pneg %p242
  $region19: #{gcn_forward.5} parent=0 // pred_check_branch
    %316 = sbr.rel (%p314) target = $region21
  $region20: #{gcn_forward.5} parent=0 // pred_region
    %v317 = vld [vmem:[%s2] sm:$0xff]
    %v318 = vld [vmem:[%s2 + $0x8] sm:$0xff]
    %v319 = vld [vmem:[%s2 + $0x10] sm:$0xff]
    %v320 = vld [vmem:[%s2 + $0x18] sm:$0xff]
    %v321 = vld [vmem:[%s2 + $0x20] sm:$0xff]
    %v322 = vld [vmem:[%s2 + $0x28] sm:$0xff]
    %v323 = vld [vmem:[%s2 + $0x30] sm:$0xff]
    %v324 = vld [vmem:[%s2 + $0x38] sm:$0xff]
    %v325 = vld [vmem:[%s2 + $0x40] sm:$0xff]
    %v326 = vld [vmem:[%s2 + $0x48] sm:$0xff]
    %v327 = vld [vmem:[%s2 + $0x50] sm:$0xff]
    %v328 = vld [vmem:[%s2 + $0x58] sm:$0xff]
    %v329 = vld [vmem:[%s2 + $0x60] sm:$0xff]
    %v330 = vld [vmem:[%s2 + $0x68] sm:$0xff]
    %v331 = vld [vmem:[%s2 + $0x70] sm:$0xff]
    %v332 = vld [vmem:[%s2 + $0x78] sm:$0xff]
    %v333 = vmax.f32 %v317, 0.0
    %v334 = vmax.f32 %v318, 0.0
    %v335 = vmax.f32 %v319, 0.0
    %v336 = vmax.f32 %v320, 0.0
    %v337 = vmax.f32 %v321, 0.0
    %v338 = vmax.f32 %v322, 0.0
    %v339 = vmax.f32 %v323, 0.0
    %v340 = vmax.f32 %v324, 0.0
    %v341 = vmax.f32 %v325, 0.0
    %v342 = vmax.f32 %v326, 0.0
    %v343 = vmax.f32 %v327, 0.0
    %v344 = vmax.f32 %v328, 0.0
    %v345 = vmax.f32 %v329, 0.0
    %v346 = vmax.f32 %v330, 0.0
    %v347 = vmax.f32 %v331, 0.0
    %v348 = vmax.f32 %v332, 0.0
    %349 = vst [vmem:[%s2] sm:$0xff] %v333
    %350 = vst [vmem:[%s2 + $0x8] sm:$0xff] %v334
    %351 = vst [vmem:[%s2 + $0x10] sm:$0xff] %v335
    %352 = vst [vmem:[%s2 + $0x18] sm:$0xff] %v336
    %353 = vst [vmem:[%s2 + $0x20] sm:$0xff] %v337
    %354 = vst [vmem:[%s2 + $0x28] sm:$0xff] %v338
    %355 = vst [vmem:[%s2 + $0x30] sm:$0xff] %v339
    %356 = vst [vmem:[%s2 + $0x38] sm:$0xff] %v340
    %357 = vst [vmem:[%s2 + $0x40] sm:$0xff] %v341
    %358 = vst [vmem:[%s2 + $0x48] sm:$0xff] %v342
    %359 = vst [vmem:[%s2 + $0x50] sm:$0xff] %v343
    %360 = vst [vmem:[%s2 + $0x58] sm:$0xff] %v344
    %361 = vst [vmem:[%s2 + $0x60] sm:$0xff] %v345
    %362 = vst [vmem:[%s2 + $0x68] sm:$0xff] %v346
    %363 = vst [vmem:[%s2 + $0x70] sm:$0xff] %v347
    %364 = vst [vmem:[%s2 + $0x78] sm:$0xff] %v348
  $region21: #{gcn_forward.5} parent=0 // pred_fallthru
    _
  // Predicated region
  $region22: #{gcn_forward.5} parent=0 // pred_check
    _
  $region23: #{gcn_forward.5} parent=0 // pred_check_branch
    %366 = sbr.rel (0) target = $region25
  $region24: #{gcn_forward.5} parent=0 // pred_region
    _
  $region25: #{gcn_forward.5} parent=0 // pred_fallthru
    _
  // Predicated region
  $region26: #{gcn_forward.5} parent=0 // pred_check
    _
  $region27: #{gcn_forward.5} parent=0 // pred_check_branch
    %368 = sbr.rel (0) target = $region29
  $region28: #{gcn_forward.5} parent=0 // pred_region
    _
  $region29: #{gcn_forward.5} parent=0 // pred_fallthru
    _

// kernel: gcn_forward.3
$region0: #{gcn_forward.3}
  #allocation0 [shape = 'u32[]', space=smem, size = 0x4, offset = 0x4, fixed_abs, tag = 'smem constant byte address 0x4 - core index']
  #allocation1 [shape = 'u32[144,128]{1,0:T(1,128)}', space=vmem, size = 0x12000, scoped, tag = 'internal scratch']
  #allocation2 [shape = 'f32[128,128]{1,0:T(8,128)}', space=vmem, size = 0x10000, scoped, tag = 'scratch operand']
  %s0 = inlined_call_operand.vmem [shape: bf16[128,128], index: 0, kind: input, shape index: {}]
  %s1 = inlined_call_operand.vmem [shape: bf16[128,128], index: 1, kind: input, shape index: {}]
  %s2 = inlined_call_operand.vmem [shape: bf16[128,128], index: 2, kind: output, shape index: {}]
  %s3 = sld [smem:[#allocation0]]
  $region30: #{gcn_forward.3} parent=0
    _
  %s5 = ssub.s32 1, %s3
  %s6 = scalar_select 0, %s5, %s3
  // Predicated region
  $region2: #{gcn_forward.3} parent=0 // pred_check
    _
  $region3: #{gcn_forward.3} parent=0 // pred_check_branch
    %8 = sbr.rel (0) target = $region5
  $region4: #{gcn_forward.3} parent=0 // pred_region
    _
  $region5: #{gcn_forward.3} parent=0 // pred_fallthru
    _
  // Predicated region
  $region6: #{gcn_forward.3} parent=0 // pred_check
    _
  $region7: #{gcn_forward.3} parent=0 // pred_check_branch
    %10 = sbr.rel (0) target = $region9
  $region8: #{gcn_forward.3} parent=0 // pred_region
    _
  $region9: #{gcn_forward.3} parent=0 // pred_fallthru
    _
  %v12 = vld [vmem:[%s0] sm:$0xf]
  %v13 = vld [vmem:[%s0 + $0x4] sm:$0xf]
  %v14 = vld [vmem:[%s0 + $0x8] sm:$0xf]
  %v15 = vld [vmem:[%s0 + $0xc] sm:$0xf]
  %v16 = vld [vmem:[%s0 + $0x10] sm:$0xf]
  %v17 = vld [vmem:[%s0 + $0x14] sm:$0xf]
  %v18 = vld [vmem:[%s0 + $0x18] sm:$0xf]
  %v19 = vld [vmem:[%s0 + $0x1c] sm:$0xf]
  %v20 = vld [vmem:[%s0 + $0x20] sm:$0xf]
  %v21 = vld [vmem:[%s0 + $0x24] sm:$0xf]
  %v22 = vld [vmem:[%s0 + $0x28] sm:$0xf]
  %v23 = vld [vmem:[%s0 + $0x2c] sm:$0xf]
  %v24 = vld [vmem:[%s0 + $0x30] sm:$0xf]
  %v25 = vld [vmem:[%s0 + $0x34] sm:$0xf]
  %v26 = vld [vmem:[%s0 + $0x38] sm:$0xf]
  %v27 = vld [vmem:[%s0 + $0x3c] sm:$0xf]
  %v28 = vld [vmem:[%s1] sm:$0xf]
  %v29 = vld [vmem:[%s1 + $0x4] sm:$0xf]
  %v30 = vld [vmem:[%s1 + $0x8] sm:$0xf]
  %v31 = vld [vmem:[%s1 + $0xc] sm:$0xf]
  %v32 = vld [vmem:[%s1 + $0x10] sm:$0xf]
  %v33 = vld [vmem:[%s1 + $0x14] sm:$0xf]
  %v34 = vld [vmem:[%s1 + $0x18] sm:$0xf]
  %v35 = vld [vmem:[%s1 + $0x1c] sm:$0xf]
  %v36 = vld [vmem:[%s1 + $0x20] sm:$0xf]
  %v37 = vld [vmem:[%s1 + $0x24] sm:$0xf]
  %v38 = vld [vmem:[%s1 + $0x28] sm:$0xf]
  %v39 = vld [vmem:[%s1 + $0x2c] sm:$0xf]
  %v40 = vld [vmem:[%s1 + $0x30] sm:$0xf]
  %v41 = vld [vmem:[%s1 + $0x34] sm:$0xf]
  %v42 = vld [vmem:[%s1 + $0x38] sm:$0xf]
  %v43 = vld [vmem:[%s1 + $0x3c] sm:$0xf]
  %v60 = vunpack.c.l.b16 %v12
  %v61 = vunpack.c.l.b16 %v13
  %v62 = vunpack.c.l.b16 %v14
  %v63 = vunpack.c.l.b16 %v15
  %v64 = vunpack.c.l.b16 %v16
  %v65 = vunpack.c.l.b16 %v17
  %v66 = vunpack.c.l.b16 %v18
  %v67 = vunpack.c.l.b16 %v19
  %v68 = vunpack.c.l.b16 %v20
  %v69 = vunpack.c.l.b16 %v21
  %v70 = vunpack.c.l.b16 %v22
  %v71 = vunpack.c.l.b16 %v23
  %v72 = vunpack.c.l.b16 %v24
  %v73 = vunpack.c.l.b16 %v25
  %v74 = vunpack.c.l.b16 %v26
  %v75 = vunpack.c.l.b16 %v27
  %v76 = vpack.c.b16 %v61, %v60
  %v77 = vpack.c.b16 %v63, %v62
  %v78 = vpack.c.b16 %v65, %v64
  %v79 = vpack.c.b16 %v67, %v66
  %v80 = vpack.c.b16 %v69, %v68
  %v81 = vpack.c.b16 %v71, %v70
  %v82 = vpack.c.b16 %v73, %v72
  %v83 = vpack.c.b16 %v75, %v74
  %v108 = vunpack.c.l.b16 %v28
  %v109 = vunpack.c.l.b16 %v29
  %v110 = vunpack.c.l.b16 %v30
  %v111 = vunpack.c.l.b16 %v31
  %v112 = vunpack.c.l.b16 %v32
  %v113 = vunpack.c.l.b16 %v33
  %v114 = vunpack.c.l.b16 %v34
  %v115 = vunpack.c.l.b16 %v35
  %v116 = vunpack.c.l.b16 %v36
  %v117 = vunpack.c.l.b16 %v37
  %v118 = vunpack.c.l.b16 %v38
  %v119 = vunpack.c.l.b16 %v39
  %v120 = vunpack.c.l.b16 %v40
  %v121 = vunpack.c.l.b16 %v41
  %v122 = vunpack.c.l.b16 %v42
  %v123 = vunpack.c.l.b16 %v43
  %v124 = vpack.c.b16 %v109, %v108
  %v125 = vpack.c.b16 %v111, %v110
  %v126 = vpack.c.b16 %v113, %v112
  %v127 = vpack.c.b16 %v115, %v114
  %v128 = vpack.c.b16 %v117, %v116
  %v129 = vpack.c.b16 %v119, %v118
  %v130 = vpack.c.b16 %v121, %v120
  %v131 = vpack.c.b16 %v123, %v122
  %140 = vmatprep.subr.bf16.mxu0 0
  %141 = vmatpush1.bf16.msra.mxu0 %v131
  %142 = vmatprep.subr.bf16.mxu0 0
  %143 = vmatpush1.bf16.msra.mxu0 %v130
  %144 = vmatprep.subr.bf16.mxu0 0
  %145 = vmatpush1.bf16.msra.mxu0 %v129
  %146 = vmatprep.subr.bf16.mxu0 0
  %147 = vmatpush1.bf16.msra.mxu0 %v128
  %148 = vmatprep.subr.bf16.mxu0 0
  %149 = vmatpush1.bf16.msra.mxu0 %v127
  %150 = vmatprep.subr.bf16.mxu0 0
  %151 = vmatpush1.bf16.msra.mxu0 %v126
  %152 = vmatprep.subr.bf16.mxu0 0
  %153 = vmatpush1.bf16.msra.mxu0 %v125
  %154 = vmatprep.subr.bf16.mxu0 0
  %155 = vmatpush1.bf16.msra.mxu0 %v124
  %156 = vmatprep.subr.bf16.mxu0 0
  %157 = vmatpush2.bf16.msra.mxu0 0
  %158 = vmatprep.subr.bf16.mxu0 0
  %159 = vmatpush2.bf16.msra.mxu0 0
  %160 = vmatprep.subr.bf16.mxu0 0
  %161 = vmatpush2.bf16.msra.mxu0 0
  %162 = vmatprep.subr.bf16.mxu0 0
  %163 = vmatpush2.bf16.msra.mxu0 0
  %164 = vmatprep.subr.bf16.mxu0 0
  %165 = vmatpush2.bf16.msra.mxu0 0
  %166 = vmatprep.subr.bf16.mxu0 0
  %167 = vmatpush2.bf16.msra.mxu0 0
  %168 = vmatprep.subr.bf16.mxu0 0
  %169 = vmatpush2.bf16.msra.mxu0 0
  %170 = vmatprep.subr.bf16.mxu0 0
  %171 = vmatpush2.bf16.msra.mxu0 0
  %172 = vmatprep.mubr.bf16.mxu0 0
  %173 = vmatmul.mubr.bf16.gmra.mxu0 %v76
  %v174 = vpop.f32.mrf.mxu0
  %v175 = vadd.f32 0.0, %v174
  %v176 = vpop.f32.mrf.mxu0
  %v177 = vpop.f32.mrf.mxu0
  %v178 = vadd.f32 0.0, %v177
  %v179 = vpop.f32.mrf.mxu0
  %180 = vmatprep.mubr.bf16.mxu0 0
  %181 = vmatmul.mubr.bf16.gmra.mxu0 %v77
  %v182 = vpop.f32.mrf.mxu0
  %v183 = vadd.f32 0.0, %v182
  %v184 = vpop.f32.mrf.mxu0
  %v185 = vpop.f32.mrf.mxu0
  %v186 = vadd.f32 0.0, %v185
  %v187 = vpop.f32.mrf.mxu0
  %188 = vmatprep.mubr.bf16.mxu0 0
  %189 = vmatmul.mubr.bf16.gmra.mxu0 %v78
  %v190 = vpop.f32.mrf.mxu0
  %v191 = vadd.f32 0.0, %v190
  %v192 = vpop.f32.mrf.mxu0
  %v193 = vpop.f32.mrf.mxu0
  %v194 = vadd.f32 0.0, %v193
  %v195 = vpop.f32.mrf.mxu0
  %196 = vmatprep.mubr.bf16.mxu0 0
  %197 = vmatmul.mubr.bf16.gmra.mxu0 %v79
  %v198 = vpop.f32.mrf.mxu0
  %v199 = vadd.f32 0.0, %v198
  %v200 = vpop.f32.mrf.mxu0
  %v201 = vpop.f32.mrf.mxu0
  %v202 = vadd.f32 0.0, %v201
  %v203 = vpop.f32.mrf.mxu0
  %204 = vmatprep.mubr.bf16.mxu0 0
  %205 = vmatmul.mubr.bf16.gmra.mxu0 %v80
  %v206 = vpop.f32.mrf.mxu0
  %v207 = vadd.f32 0.0, %v206
  %v208 = vpop.f32.mrf.mxu0
  %v209 = vpop.f32.mrf.mxu0
  %v210 = vadd.f32 0.0, %v209
  %v211 = vpop.f32.mrf.mxu0
  %212 = vmatprep.mubr.bf16.mxu0 0
  %213 = vmatmul.mubr.bf16.gmra.mxu0 %v81
  %v214 = vpop.f32.mrf.mxu0
  %v215 = vadd.f32 0.0, %v214
  %v216 = vpop.f32.mrf.mxu0
  %v217 = vpop.f32.mrf.mxu0
  %v218 = vadd.f32 0.0, %v217
  %v219 = vpop.f32.mrf.mxu0
  %220 = vmatprep.mubr.bf16.mxu0 0
  %221 = vmatmul.mubr.bf16.gmra.mxu0 %v82
  %v222 = vpop.f32.mrf.mxu0
  %v223 = vadd.f32 0.0, %v222
  %v224 = vpop.f32.mrf.mxu0
  %v225 = vpop.f32.mrf.mxu0
  %v226 = vadd.f32 0.0, %v225
  %v227 = vpop.f32.mrf.mxu0
  %228 = vmatprep.mubr.bf16.mxu0 0
  %229 = vmatmul.mubr.bf16.gmra.mxu0 %v83
  %v230 = vpop.f32.mrf.mxu0
  %v231 = vadd.f32 0.0, %v230
  %v232 = vpop.f32.mrf.mxu0
  %v233 = vpop.f32.mrf.mxu0
  %v234 = vadd.f32 0.0, %v233
  %v235 = vpop.f32.mrf.mxu0
  %236 = vdwg.mxu0
  %p237 = scmp.eq.s32.totalorder 0, 0
  // Predicated region
  $region10: #{gcn_forward.3} parent=0 // pred_check
    %p238 = pneg %p237
  $region11: #{gcn_forward.3} parent=0 // pred_check_branch
    %240 = sbr.rel (%p238) target = $region13
  $region12: #{gcn_forward.3} parent=0 // pred_region
    %241 = vst [vmem:[#allocation2] sm:$0xff] %v175
    %242 = vst [vmem:[#allocation2 + $0x8] sm:$0xff] %v178
    %243 = vst [vmem:[#allocation2 + $0x10] sm:$0xff] %v183
    %244 = vst [vmem:[#allocation2 + $0x18] sm:$0xff] %v186
    %245 = vst [vmem:[#allocation2 + $0x20] sm:$0xff] %v191
    %246 = vst [vmem:[#allocation2 + $0x28] sm:$0xff] %v194
    %247 = vst [vmem:[#allocation2 + $0x30] sm:$0xff] %v199
    %248 = vst [vmem:[#allocation2 + $0x38] sm:$0xff] %v202
    %249 = vst [vmem:[#allocation2 + $0x40] sm:$0xff] %v207
    %250 = vst [vmem:[#allocation2 + $0x48] sm:$0xff] %v210
    %251 = vst [vmem:[#allocation2 + $0x50] sm:$0xff] %v215
    %252 = vst [vmem:[#allocation2 + $0x58] sm:$0xff] %v218
    %253 = vst [vmem:[#allocation2 + $0x60] sm:$0xff] %v223
    %254 = vst [vmem:[#allocation2 + $0x68] sm:$0xff] %v226
    %255 = vst [vmem:[#allocation2 + $0x70] sm:$0xff] %v231
    %256 = vst [vmem:[#allocation2 + $0x78] sm:$0xff] %v234
  $region13: #{gcn_forward.3} parent=0 // pred_fallthru
    _
  %p257 = scmp.ne.s32.totalorder 0, 0
  // Predicated region
  $region14: #{gcn_forward.3} parent=0 // pred_check
    %p258 = pneg %p257
  $region15: #{gcn_forward.3} parent=0 // pred_check_branch
    %260 = sbr.rel (%p258) target = $region17
  $region16: #{gcn_forward.3} parent=0 // pred_region
    %v261 = vld [vmem:[#allocation2] sm:$0xff]
    %v262 = vld [vmem:[#allocation2 + $0x8] sm:$0xff]
    %v263 = vld [vmem:[#allocation2 + $0x10] sm:$0xff]
    %v264 = vld [vmem:[#allocation2 + $0x18] sm:$0xff]
    %v265 = vld [vmem:[#allocation2 + $0x20] sm:$0xff]
    %v266 = vld [vmem:[#allocation2 + $0x28] sm:$0xff]
    %v267 = vld [vmem:[#allocation2 + $0x30] sm:$0xff]
    %v268 = vld [vmem:[#allocation2 + $0x38] sm:$0xff]
    %v269 = vld [vmem:[#allocation2 + $0x40] sm:$0xff]
    %v270 = vld [vmem:[#allocation2 + $0x48] sm:$0xff]
    %v271 = vld [vmem:[#allocation2 + $0x50] sm:$0xff]
    %v272 = vld [vmem:[#allocation2 + $0x58] sm:$0xff]
    %v273 = vld [vmem:[#allocation2 + $0x60] sm:$0xff]
    %v274 = vld [vmem:[#allocation2 + $0x68] sm:$0xff]
    %v275 = vld [vmem:[#allocation2 + $0x70] sm:$0xff]
    %v276 = vld [vmem:[#allocation2 + $0x78] sm:$0xff]
    %v277 = vadd.f32 %v261, %v175
    %v278 = vadd.f32 %v262, %v178
    %v279 = vadd.f32 %v263, %v183
    %v280 = vadd.f32 %v264, %v186
    %v281 = vadd.f32 %v265, %v191
    %v282 = vadd.f32 %v266, %v194
    %v283 = vadd.f32 %v267, %v199
    %v284 = vadd.f32 %v268, %v202
    %v285 = vadd.f32 %v269, %v207
    %v286 = vadd.f32 %v270, %v210
    %v287 = vadd.f32 %v271, %v215
    %v288 = vadd.f32 %v272, %v218
    %v289 = vadd.f32 %v273, %v223
    %v290 = vadd.f32 %v274, %v226
    %v291 = vadd.f32 %v275, %v231
    %v292 = vadd.f32 %v276, %v234
    %293 = vst [vmem:[#allocation2] sm:$0xff] %v277
    %294 = vst [vmem:[#allocation2 + $0x8] sm:$0xff] %v278
    %295 = vst [vmem:[#allocation2 + $0x10] sm:$0xff] %v279
    %296 = vst [vmem:[#allocation2 + $0x18] sm:$0xff] %v280
    %297 = vst [vmem:[#allocation2 + $0x20] sm:$0xff] %v281
    %298 = vst [vmem:[#allocation2 + $0x28] sm:$0xff] %v282
    %299 = vst [vmem:[#allocation2 + $0x30] sm:$0xff] %v283
    %300 = vst [vmem:[#allocation2 + $0x38] sm:$0xff] %v284
    %301 = vst [vmem:[#allocation2 + $0x40] sm:$0xff] %v285
    %302 = vst [vmem:[#allocation2 + $0x48] sm:$0xff] %v286
    %303 = vst [vmem:[#allocation2 + $0x50] sm:$0xff] %v287
    %304 = vst [vmem:[#allocation2 + $0x58] sm:$0xff] %v288
    %305 = vst [vmem:[#allocation2 + $0x60] sm:$0xff] %v289
    %306 = vst [vmem:[#allocation2 + $0x68] sm:$0xff] %v290
    %307 = vst [vmem:[#allocation2 + $0x70] sm:$0xff] %v291
    %308 = vst [vmem:[#allocation2 + $0x78] sm:$0xff] %v292
  $region17: #{gcn_forward.3} parent=0 // pred_fallthru
    _
  // Predicated region
  $region18: #{gcn_forward.3} parent=0 // pred_check
    %p309 = pneg %p237
  $region19: #{gcn_forward.3} parent=0 // pred_check_branch
    %311 = sbr.rel (%p309) target = $region21
  $region20: #{gcn_forward.3} parent=0 // pred_region
    %v312 = vld [vmem:[#allocation2] sm:$0xff]
    %v313 = vld [vmem:[#allocation2 + $0x8] sm:$0xff]
    %v314 = vld [vmem:[#allocation2 + $0x10] sm:$0xff]
    %v315 = vld [vmem:[#allocation2 + $0x18] sm:$0xff]
    %v316 = vld [vmem:[#allocation2 + $0x20] sm:$0xff]
    %v317 = vld [vmem:[#allocation2 + $0x28] sm:$0xff]
    %v318 = vld [vmem:[#allocation2 + $0x30] sm:$0xff]
    %v319 = vld [vmem:[#allocation2 + $0x38] sm:$0xff]
    %v320 = vld [vmem:[#allocation2 + $0x40] sm:$0xff]
    %v321 = vld [vmem:[#allocation2 + $0x48] sm:$0xff]
    %v322 = vld [vmem:[#allocation2 + $0x50] sm:$0xff]
    %v323 = vld [vmem:[#allocation2 + $0x58] sm:$0xff]
    %v324 = vld [vmem:[#allocation2 + $0x60] sm:$0xff]
    %v325 = vld [vmem:[#allocation2 + $0x68] sm:$0xff]
    %v326 = vld [vmem:[#allocation2 + $0x70] sm:$0xff]
    %v327 = vld [vmem:[#allocation2 + $0x78] sm:$0xff]
    %v328 = vpack.c.bf16 %v313, %v312
    %v329 = vpack.c.bf16 %v315, %v314
    %v330 = vpack.c.bf16 %v317, %v316
    %v331 = vpack.c.bf16 %v319, %v318
    %v332 = vpack.c.bf16 %v321, %v320
    %v333 = vpack.c.bf16 %v323, %v322
    %v334 = vpack.c.bf16 %v325, %v324
    %v335 = vpack.c.bf16 %v327, %v326
    %v344 = vunpack.c.l.b16 %v328
    %v345 = vunpack.c.h.b16 %v328
    %v346 = vunpack.c.l.b16 %v329
    %v347 = vunpack.c.h.b16 %v329
    %v348 = vunpack.c.l.b16 %v330
    %v349 = vunpack.c.h.b16 %v330
    %v350 = vunpack.c.l.b16 %v331
    %v351 = vunpack.c.h.b16 %v331
    %v352 = vunpack.c.l.b16 %v332
    %v353 = vunpack.c.h.b16 %v332
    %v354 = vunpack.c.l.b16 %v333
    %v355 = vunpack.c.h.b16 %v333
    %v356 = vunpack.c.l.b16 %v334
    %v357 = vunpack.c.h.b16 %v334
    %v358 = vunpack.c.l.b16 %v335
    %v359 = vunpack.c.h.b16 %v335
    %v360 = vpack.c.b16 %v344, %v344
    %v361 = vpack.c.b16 %v345, %v345
    %v362 = vpack.c.b16 %v346, %v346
    %v363 = vpack.c.b16 %v347, %v347
    %v364 = vpack.c.b16 %v348, %v348
    %v365 = vpack.c.b16 %v349, %v349
    %v366 = vpack.c.b16 %v350, %v350
    %v367 = vpack.c.b16 %v351, %v351
    %v368 = vpack.c.b16 %v352, %v352
    %v369 = vpack.c.b16 %v353, %v353
    %v370 = vpack.c.b16 %v354, %v354
    %v371 = vpack.c.b16 %v355, %v355
    %v372 = vpack.c.b16 %v356, %v356
    %v373 = vpack.c.b16 %v357, %v357
    %v374 = vpack.c.b16 %v358, %v358
    %v375 = vpack.c.b16 %v359, %v359
    %392 = vst [vmem:[%s2] sm:$0xf] %v360
    %393 = vst [vmem:[%s2 + $0x4] sm:$0xf] %v361
    %394 = vst [vmem:[%s2 + $0x8] sm:$0xf] %v362
    %395 = vst [vmem:[%s2 + $0xc] sm:$0xf] %v363
    %396 = vst [vmem:[%s2 + $0x10] sm:$0xf] %v364
    %397 = vst [vmem:[%s2 + $0x14] sm:$0xf] %v365
    %398 = vst [vmem:[%s2 + $0x18] sm:$0xf] %v366
    %399 = vst [vmem:[%s2 + $0x1c] sm:$0xf] %v367
    %400 = vst [vmem:[%s2 + $0x20] sm:$0xf] %v368
    %401 = vst [vmem:[%s2 + $0x24] sm:$0xf] %v369
    %402 = vst [vmem:[%s2 + $0x28] sm:$0xf] %v370
    %403 = vst [vmem:[%s2 + $0x2c] sm:$0xf] %v371
    %404 = vst [vmem:[%s2 + $0x30] sm:$0xf] %v372
    %405 = vst [vmem:[%s2 + $0x34] sm:$0xf] %v373
    %406 = vst [vmem:[%s2 + $0x38] sm:$0xf] %v374
    %407 = vst [vmem:[%s2 + $0x3c] sm:$0xf] %v375
  $region21: #{gcn_forward.3} parent=0 // pred_fallthru
    _
  // Predicated region
  $region22: #{gcn_forward.3} parent=0 // pred_check
    _
  $region23: #{gcn_forward.3} parent=0 // pred_check_branch
    %409 = sbr.rel (0) target = $region25
  $region24: #{gcn_forward.3} parent=0 // pred_region
    _
  $region25: #{gcn_forward.3} parent=0 // pred_fallthru
    _
  // Predicated region
  $region26: #{gcn_forward.3} parent=0 // pred_check
    _
  $region27: #{gcn_forward.3} parent=0 // pred_check_branch
    %411 = sbr.rel (0) target = $region29
  $region28: #{gcn_forward.3} parent=0 // pred_region
    _
  $region29: #{gcn_forward.3} parent=0 // pred_fallthru
    _

// kernel: gcn_forward.4
$region0: #{gcn_forward.4}
  #allocation0 [shape = 'u32[]', space=smem, size = 0x4, offset = 0x4, fixed_abs, tag = 'smem constant byte address 0x4 - core index']
  #allocation1 [shape = 'u32[144,128]{1,0:T(1,128)}', space=vmem, size = 0x12000, scoped, tag = 'internal scratch']
  #allocation2 [shape = 'f32[128,128]{1,0:T(8,128)}', space=vmem, size = 0x10000, scoped, tag = 'scratch operand']
  %s0 = inlined_call_operand.vmem [shape: bf16[128,128], index: 0, kind: input, shape index: {}]
  %s1 = inlined_call_operand.vmem [shape: bf16[128,128], index: 1, kind: input, shape index: {}]
  %s2 = inlined_call_operand.vmem [shape: bf16[128,128], index: 2, kind: input, shape index: {}]
  %s3 = inlined_call_operand.vmem [shape: bf16[128,128], index: 3, kind: output, shape index: {}]
  %s4 = sld [smem:[#allocation0]]
  $region34: #{gcn_forward.4} parent=0
    _
  %s6 = ssub.s32 1, %s4
  %s7 = scalar_select 0, %s6, %s4
  // Predicated region
  $region2: #{gcn_forward.4} parent=0 // pred_check
    _
  $region3: #{gcn_forward.4} parent=0 // pred_check_branch
    %9 = sbr.rel (0) target = $region5
  $region4: #{gcn_forward.4} parent=0 // pred_region
    _
  $region5: #{gcn_forward.4} parent=0 // pred_fallthru
    _
  // Predicated region
  $region6: #{gcn_forward.4} parent=0 // pred_check
    _
  $region7: #{gcn_forward.4} parent=0 // pred_check_branch
    %11 = sbr.rel (0) target = $region9
  $region8: #{gcn_forward.4} parent=0 // pred_region
    _
  $region9: #{gcn_forward.4} parent=0 // pred_fallthru
    _
  // Predicated region
  $region10: #{gcn_forward.4} parent=0 // pred_check
    _
  $region11: #{gcn_forward.4} parent=0 // pred_check_branch
    %13 = sbr.rel (0) target = $region13
  $region12: #{gcn_forward.4} parent=0 // pred_region
    _
  $region13: #{gcn_forward.4} parent=0 // pred_fallthru
    _
  %s15 = smul.u32 0, 128
  %s16 = sshra.s32 %s15, 3
  %s17 = sand.u32 %s15, 7
  %s18 = smul.addr %s16, 4
  %s19 = scalar_lea.vmem %s1, %s18
  %v20 = vld [vmem:[%s19] sm:$0xf]
  %v21 = vld [vmem:[%s19 + $0x4] sm:$0xf]
  %v22 = vld [vmem:[%s19 + $0x8] sm:$0xf]
  %v23 = vld [vmem:[%s19 + $0xc] sm:$0xf]
  %v24 = vld [vmem:[%s19 + $0x10] sm:$0xf]
  %v25 = vld [vmem:[%s19 + $0x14] sm:$0xf]
  %v26 = vld [vmem:[%s19 + $0x18] sm:$0xf]
  %v27 = vld [vmem:[%s19 + $0x1c] sm:$0xf]
  %v28 = vld [vmem:[%s19 + $0x20] sm:$0xf]
  %v29 = vld [vmem:[%s19 + $0x24] sm:$0xf]
  %v30 = vld [vmem:[%s19 + $0x28] sm:$0xf]
  %v31 = vld [vmem:[%s19 + $0x2c] sm:$0xf]
  %v32 = vld [vmem:[%s19 + $0x30] sm:$0xf]
  %v33 = vld [vmem:[%s19 + $0x34] sm:$0xf]
  %v34 = vld [vmem:[%s19 + $0x38] sm:$0xf]
  %v35 = vld [vmem:[%s19 + $0x3c] sm:$0xf]
  %v36 = vld [vmem:[%s0] sm:$0xf]
  %v37 = vld [vmem:[%s0 + $0x4] sm:$0xf]
  %v38 = vld [vmem:[%s0 + $0x8] sm:$0xf]
  %v39 = vld [vmem:[%s0 + $0xc] sm:$0xf]
  %v40 = vld [vmem:[%s0 + $0x10] sm:$0xf]
  %v41 = vld [vmem:[%s0 + $0x14] sm:$0xf]
  %v42 = vld [vmem:[%s0 + $0x18] sm:$0xf]
  %v43 = vld [vmem:[%s0 + $0x1c] sm:$0xf]
  %v44 = vld [vmem:[%s0 + $0x20] sm:$0xf]
  %v45 = vld [vmem:[%s0 + $0x24] sm:$0xf]
  %v46 = vld [vmem:[%s0 + $0x28] sm:$0xf]
  %v47 = vld [vmem:[%s0 + $0x2c] sm:$0xf]
  %v48 = vld [vmem:[%s0 + $0x30] sm:$0xf]
  %v49 = vld [vmem:[%s0 + $0x34] sm:$0xf]
  %v50 = vld [vmem:[%s0 + $0x38] sm:$0xf]
  %v51 = vld [vmem:[%s0 + $0x3c] sm:$0xf]
  %v68 = vunpack.c.l.b16 %v36
  %v69 = vunpack.c.l.b16 %v37
  %v70 = vunpack.c.l.b16 %v38
  %v71 = vunpack.c.l.b16 %v39
  %v72 = vunpack.c.l.b16 %v40
  %v73 = vunpack.c.l.b16 %v41
  %v74 = vunpack.c.l.b16 %v42
  %v75 = vunpack.c.l.b16 %v43
  %v76 = vunpack.c.l.b16 %v44
  %v77 = vunpack.c.l.b16 %v45
  %v78 = vunpack.c.l.b16 %v46
  %v79 = vunpack.c.l.b16 %v47
  %v80 = vunpack.c.l.b16 %v48
  %v81 = vunpack.c.l.b16 %v49
  %v82 = vunpack.c.l.b16 %v50
  %v83 = vunpack.c.l.b16 %v51
  %v84 = vpack.c.b16 %v69, %v68
  %v85 = vpack.c.b16 %v71, %v70
  %v86 = vpack.c.b16 %v73, %v72
  %v87 = vpack.c.b16 %v75, %v74
  %v88 = vpack.c.b16 %v77, %v76
  %v89 = vpack.c.b16 %v79, %v78
  %v90 = vpack.c.b16 %v81, %v80
  %v91 = vpack.c.b16 %v83, %v82
  %v116 = vunpack.c.l.b16 %v20
  %v117 = vunpack.c.l.b16 %v21
  %v118 = vunpack.c.l.b16 %v22
  %v119 = vunpack.c.l.b16 %v23
  %v120 = vunpack.c.l.b16 %v24
  %v121 = vunpack.c.l.b16 %v25
  %v122 = vunpack.c.l.b16 %v26
  %v123 = vunpack.c.l.b16 %v27
  %v124 = vunpack.c.l.b16 %v28
  %v125 = vunpack.c.l.b16 %v29
  %v126 = vunpack.c.l.b16 %v30
  %v127 = vunpack.c.l.b16 %v31
  %v128 = vunpack.c.l.b16 %v32
  %v129 = vunpack.c.l.b16 %v33
  %v130 = vunpack.c.l.b16 %v34
  %v131 = vunpack.c.l.b16 %v35
  %v132 = vpack.c.b16 %v117, %v116
  %v133 = vpack.c.b16 %v119, %v118
  %v134 = vpack.c.b16 %v121, %v120
  %v135 = vpack.c.b16 %v123, %v122
  %v136 = vpack.c.b16 %v125, %v124
  %v137 = vpack.c.b16 %v127, %v126
  %v138 = vpack.c.b16 %v129, %v128
  %v139 = vpack.c.b16 %v131, %v130
  %148 = vmatprep.subr.bf16.mxu0 0
  %149 = vmatpush1.bf16.msra.mxu0 %v139
  %150 = vmatprep.subr.bf16.mxu0 0
  %151 = vmatpush1.bf16.msra.mxu0 %v138
  %152 = vmatprep.subr.bf16.mxu0 0
  %153 = vmatpush1.bf16.msra.mxu0 %v137
  %154 = vmatprep.subr.bf16.mxu0 0
  %155 = vmatpush1.bf16.msra.mxu0 %v136
  %156 = vmatprep.subr.bf16.mxu0 0
  %157 = vmatpush1.bf16.msra.mxu0 %v135
  %158 = vmatprep.subr.bf16.mxu0 0
  %159 = vmatpush1.bf16.msra.mxu0 %v134
  %160 = vmatprep.subr.bf16.mxu0 0
  %161 = vmatpush1.bf16.msra.mxu0 %v133
  %162 = vmatprep.subr.bf16.mxu0 0
  %163 = vmatpush1.bf16.msra.mxu0 %v132
  %164 = vmatprep.subr.bf16.mxu0 0
  %165 = vmatpush2.bf16.msra.mxu0 0
  %166 = vmatprep.subr.bf16.mxu0 0
  %167 = vmatpush2.bf16.msra.mxu0 0
  %168 = vmatprep.subr.bf16.mxu0 0
  %169 = vmatpush2.bf16.msra.mxu0 0
  %170 = vmatprep.subr.bf16.mxu0 0
  %171 = vmatpush2.bf16.msra.mxu0 0
  %172 = vmatprep.subr.bf16.mxu0 0
  %173 = vmatpush2.bf16.msra.mxu0 0
  %174 = vmatprep.subr.bf16.mxu0 0
  %175 = vmatpush2.bf16.msra.mxu0 0
  %176 = vmatprep.subr.bf16.mxu0 0
  %177 = vmatpush2.bf16.msra.mxu0 0
  %178 = vmatprep.subr.bf16.mxu0 0
  %179 = vmatpush2.bf16.msra.mxu0 0
  %180 = vmatprep.mubr.bf16.mxu0 0
  %181 = vmatmul.mubr.bf16.gmra.mxu0 %v84
  %v182 = vpop.f32.mrf.mxu0
  %v183 = vadd.f32 0.0, %v182
  %v184 = vpop.f32.mrf.mxu0
  %v185 = vpop.f32.mrf.mxu0
  %v186 = vadd.f32 0.0, %v185
  %v187 = vpop.f32.mrf.mxu0
  %188 = vmatprep.mubr.bf16.mxu0 0
  %189 = vmatmul.mubr.bf16.gmra.mxu0 %v85
  %v190 = vpop.f32.mrf.mxu0
  %v191 = vadd.f32 0.0, %v190
  %v192 = vpop.f32.mrf.mxu0
  %v193 = vpop.f32.mrf.mxu0
  %v194 = vadd.f32 0.0, %v193
  %v195 = vpop.f32.mrf.mxu0
  %196 = vmatprep.mubr.bf16.mxu0 0
  %197 = vmatmul.mubr.bf16.gmra.mxu0 %v86
  %v198 = vpop.f32.mrf.mxu0
  %v199 = vadd.f32 0.0, %v198
  %v200 = vpop.f32.mrf.mxu0
  %v201 = vpop.f32.mrf.mxu0
  %v202 = vadd.f32 0.0, %v201
  %v203 = vpop.f32.mrf.mxu0
  %204 = vmatprep.mubr.bf16.mxu0 0
  %205 = vmatmul.mubr.bf16.gmra.mxu0 %v87
  %v206 = vpop.f32.mrf.mxu0
  %v207 = vadd.f32 0.0, %v206
  %v208 = vpop.f32.mrf.mxu0
  %v209 = vpop.f32.mrf.mxu0
  %v210 = vadd.f32 0.0, %v209
  %v211 = vpop.f32.mrf.mxu0
  %212 = vmatprep.mubr.bf16.mxu0 0
  %213 = vmatmul.mubr.bf16.gmra.mxu0 %v88
  %v214 = vpop.f32.mrf.mxu0
  %v215 = vadd.f32 0.0, %v214
  %v216 = vpop.f32.mrf.mxu0
  %v217 = vpop.f32.mrf.mxu0
  %v218 = vadd.f32 0.0, %v217
  %v219 = vpop.f32.mrf.mxu0
  %220 = vmatprep.mubr.bf16.mxu0 0
  %221 = vmatmul.mubr.bf16.gmra.mxu0 %v89
  %v222 = vpop.f32.mrf.mxu0
  %v223 = vadd.f32 0.0, %v222
  %v224 = vpop.f32.mrf.mxu0
  %v225 = vpop.f32.mrf.mxu0
  %v226 = vadd.f32 0.0, %v225
  %v227 = vpop.f32.mrf.mxu0
  %228 = vmatprep.mubr.bf16.mxu0 0
  %229 = vmatmul.mubr.bf16.gmra.mxu0 %v90
  %v230 = vpop.f32.mrf.mxu0
  %v231 = vadd.f32 0.0, %v230
  %v232 = vpop.f32.mrf.mxu0
  %v233 = vpop.f32.mrf.mxu0
  %v234 = vadd.f32 0.0, %v233
  %v235 = vpop.f32.mrf.mxu0
  %236 = vmatprep.mubr.bf16.mxu0 0
  %237 = vmatmul.mubr.bf16.gmra.mxu0 %v91
  %v238 = vpop.f32.mrf.mxu0
  %v239 = vadd.f32 0.0, %v238
  %v240 = vpop.f32.mrf.mxu0
  %v241 = vpop.f32.mrf.mxu0
  %v242 = vadd.f32 0.0, %v241
  %v243 = vpop.f32.mrf.mxu0
  %244 = vdwg.mxu0
  %p245 = scmp.eq.s32.totalorder 0, 0
  // Predicated region
  $region14: #{gcn_forward.4} parent=0 // pred_check
    %p246 = pneg %p245
  $region15: #{gcn_forward.4} parent=0 // pred_check_branch
    %248 = sbr.rel (%p246) target = $region17
  $region16: #{gcn_forward.4} parent=0 // pred_region
    %249 = vst [vmem:[#allocation2] sm:$0xff] %v183
    %250 = vst [vmem:[#allocation2 + $0x8] sm:$0xff] %v186
    %251 = vst [vmem:[#allocation2 + $0x10] sm:$0xff] %v191
    %252 = vst [vmem:[#allocation2 + $0x18] sm:$0xff] %v194
    %253 = vst [vmem:[#allocation2 + $0x20] sm:$0xff] %v199
    %254 = vst [vmem:[#allocation2 + $0x28] sm:$0xff] %v202
    %255 = vst [vmem:[#allocation2 + $0x30] sm:$0xff] %v207
    %256 = vst [vmem:[#allocation2 + $0x38] sm:$0xff] %v210
    %257 = vst [vmem:[#allocation2 + $0x40] sm:$0xff] %v215
    %258 = vst [vmem:[#allocation2 + $0x48] sm:$0xff] %v218
    %259 = vst [vmem:[#allocation2 + $0x50] sm:$0xff] %v223
    %260 = vst [vmem:[#allocation2 + $0x58] sm:$0xff] %v226
    %261 = vst [vmem:[#allocation2 + $0x60] sm:$0xff] %v231
    %262 = vst [vmem:[#allocation2 + $0x68] sm:$0xff] %v234
    %263 = vst [vmem:[#allocation2 + $0x70] sm:$0xff] %v239
    %264 = vst [vmem:[#allocation2 + $0x78] sm:$0xff] %v242
  $region17: #{gcn_forward.4} parent=0 // pred_fallthru
    _
  %p265 = scmp.ne.s32.totalorder 0, 0
  // Predicated region
  $region18: #{gcn_forward.4} parent=0 // pred_check
    %p266 = pneg %p265
  $region19: #{gcn_forward.4} parent=0 // pred_check_branch
    %268 = sbr.rel (%p266) target = $region21
  $region20: #{gcn_forward.4} parent=0 // pred_region
    %v269 = vld [vmem:[#allocation2] sm:$0xff]
    %v270 = vld [vmem:[#allocation2 + $0x8] sm:$0xff]
    %v271 = vld [vmem:[#allocation2 + $0x10] sm:$0xff]
    %v272 = vld [vmem:[#allocation2 + $0x18] sm:$0xff]
    %v273 = vld [vmem:[#allocation2 + $0x20] sm:$0xff]
    %v274 = vld [vmem:[#allocation2 + $0x28] sm:$0xff]
    %v275 = vld [vmem:[#allocation2 + $0x30] sm:$0xff]
    %v276 = vld [vmem:[#allocation2 + $0x38] sm:$0xff]
    %v277 = vld [vmem:[#allocation2 + $0x40] sm:$0xff]
    %v278 = vld [vmem:[#allocation2 + $0x48] sm:$0xff]
    %v279 = vld [vmem:[#allocation2 + $0x50] sm:$0xff]
    %v280 = vld [vmem:[#allocation2 + $0x58] sm:$0xff]
    %v281 = vld [vmem:[#allocation2 + $0x60] sm:$0xff]
    %v282 = vld [vmem:[#allocation2 + $0x68] sm:$0xff]
    %v283 = vld [vmem:[#allocation2 + $0x70] sm:$0xff]
    %v284 = vld [vmem:[#allocation2 + $0x78] sm:$0xff]
    %v285 = vadd.f32 %v269, %v183
    %v286 = vadd.f32 %v270, %v186
    %v287 = vadd.f32 %v271, %v191
    %v288 = vadd.f32 %v272, %v194
    %v289 = vadd.f32 %v273, %v199
    %v290 = vadd.f32 %v274, %v202
    %v291 = vadd.f32 %v275, %v207
    %v292 = vadd.f32 %v276, %v210
    %v293 = vadd.f32 %v277, %v215
    %v294 = vadd.f32 %v278, %v218
    %v295 = vadd.f32 %v279, %v223
    %v296 = vadd.f32 %v280, %v226
    %v297 = vadd.f32 %v281, %v231
    %v298 = vadd.f32 %v282, %v234
    %v299 = vadd.f32 %v283, %v239
    %v300 = vadd.f32 %v284, %v242
    %301 = vst [vmem:[#allocation2] sm:$0xff] %v285
    %302 = vst [vmem:[#allocation2 + $0x8] sm:$0xff] %v286
    %303 = vst [vmem:[#allocation2 + $0x10] sm:$0xff] %v287
    %304 = vst [vmem:[#allocation2 + $0x18] sm:$0xff] %v288
    %305 = vst [vmem:[#allocation2 + $0x20] sm:$0xff] %v289
    %306 = vst [vmem:[#allocation2 + $0x28] sm:$0xff] %v290
    %307 = vst [vmem:[#allocation2 + $0x30] sm:$0xff] %v291
    %308 = vst [vmem:[#allocation2 + $0x38] sm:$0xff] %v292
    %309 = vst [vmem:[#allocation2 + $0x40] sm:$0xff] %v293
    %310 = vst [vmem:[#allocation2 + $0x48] sm:$0xff] %v294
    %311 = vst [vmem:[#allocation2 + $0x50] sm:$0xff] %v295
    %312 = vst [vmem:[#allocation2 + $0x58] sm:$0xff] %v296
    %313 = vst [vmem:[#allocation2 + $0x60] sm:$0xff] %v297
    %314 = vst [vmem:[#allocation2 + $0x68] sm:$0xff] %v298
    %315 = vst [vmem:[#allocation2 + $0x70] sm:$0xff] %v299
    %316 = vst [vmem:[#allocation2 + $0x78] sm:$0xff] %v300
  $region21: #{gcn_forward.4} parent=0 // pred_fallthru
    _
  // Predicated region
  $region22: #{gcn_forward.4} parent=0 // pred_check
    %p317 = pneg %p245
  $region23: #{gcn_forward.4} parent=0 // pred_check_branch
    %319 = sbr.rel (%p317) target = $region25
  $region24: #{gcn_forward.4} parent=0 // pred_region
    %v320 = vld [vmem:[#allocation2] sm:$0xff]
    %v321 = vld [vmem:[#allocation2 + $0x8] sm:$0xff]
    %v322 = vld [vmem:[#allocation2 + $0x10] sm:$0xff]
    %v323 = vld [vmem:[#allocation2 + $0x18] sm:$0xff]
    %v324 = vld [vmem:[#allocation2 + $0x20] sm:$0xff]
    %v325 = vld [vmem:[#allocation2 + $0x28] sm:$0xff]
    %v326 = vld [vmem:[#allocation2 + $0x30] sm:$0xff]
    %v327 = vld [vmem:[#allocation2 + $0x38] sm:$0xff]
    %v328 = vld [vmem:[#allocation2 + $0x40] sm:$0xff]
    %v329 = vld [vmem:[#allocation2 + $0x48] sm:$0xff]
    %v330 = vld [vmem:[#allocation2 + $0x50] sm:$0xff]
    %v331 = vld [vmem:[#allocation2 + $0x58] sm:$0xff]
    %v332 = vld [vmem:[#allocation2 + $0x60] sm:$0xff]
    %v333 = vld [vmem:[#allocation2 + $0x68] sm:$0xff]
    %v334 = vld [vmem:[#allocation2 + $0x70] sm:$0xff]
    %v335 = vld [vmem:[#allocation2 + $0x78] sm:$0xff]
    %v336 = vmax.f32 %v320, 0.0
    %v337 = vmax.f32 %v321, 0.0
    %v338 = vmax.f32 %v322, 0.0
    %v339 = vmax.f32 %v323, 0.0
    %v340 = vmax.f32 %v324, 0.0
    %v341 = vmax.f32 %v325, 0.0
    %v342 = vmax.f32 %v326, 0.0
    %v343 = vmax.f32 %v327, 0.0
    %v344 = vmax.f32 %v328, 0.0
    %v345 = vmax.f32 %v329, 0.0
    %v346 = vmax.f32 %v330, 0.0
    %v347 = vmax.f32 %v331, 0.0
    %v348 = vmax.f32 %v332, 0.0
    %v349 = vmax.f32 %v333, 0.0
    %v350 = vmax.f32 %v334, 0.0
    %v351 = vmax.f32 %v335, 0.0
    %v352 = vpack.c.bf16 %v337, %v336
    %v353 = vpack.c.bf16 %v339, %v338
    %v354 = vpack.c.bf16 %v341, %v340
    %v355 = vpack.c.bf16 %v343, %v342
    %v356 = vpack.c.bf16 %v345, %v344
    %v357 = vpack.c.bf16 %v347, %v346
    %v358 = vpack.c.bf16 %v349, %v348
    %v359 = vpack.c.bf16 %v351, %v350
    %v360 = vld [vmem:[%s2] sm:$0xf]
    %v361 = vld [vmem:[%s2 + $0x4] sm:$0xf]
    %v362 = vld [vmem:[%s2 + $0x8] sm:$0xf]
    %v363 = vld [vmem:[%s2 + $0xc] sm:$0xf]
    %v364 = vld [vmem:[%s2 + $0x10] sm:$0xf]
    %v365 = vld [vmem:[%s2 + $0x14] sm:$0xf]
    %v366 = vld [vmem:[%s2 + $0x18] sm:$0xf]
    %v367 = vld [vmem:[%s2 + $0x1c] sm:$0xf]
    %v368 = vld [vmem:[%s2 + $0x20] sm:$0xf]
    %v369 = vld [vmem:[%s2 + $0x24] sm:$0xf]
    %v370 = vld [vmem:[%s2 + $0x28] sm:$0xf]
    %v371 = vld [vmem:[%s2 + $0x2c] sm:$0xf]
    %v372 = vld [vmem:[%s2 + $0x30] sm:$0xf]
    %v373 = vld [vmem:[%s2 + $0x34] sm:$0xf]
    %v374 = vld [vmem:[%s2 + $0x38] sm:$0xf]
    %v375 = vld [vmem:[%s2 + $0x3c] sm:$0xf]
    %v392 = vunpack.c.l.b16 %v360
    %v393 = vunpack.c.l.b16 %v361
    %v394 = vunpack.c.l.b16 %v362
    %v395 = vunpack.c.l.b16 %v363
    %v396 = vunpack.c.l.b16 %v364
    %v397 = vunpack.c.l.b16 %v365
    %v398 = vunpack.c.l.b16 %v366
    %v399 = vunpack.c.l.b16 %v367
    %v400 = vunpack.c.l.b16 %v368
    %v401 = vunpack.c.l.b16 %v369
    %v402 = vunpack.c.l.b16 %v370
    %v403 = vunpack.c.l.b16 %v371
    %v404 = vunpack.c.l.b16 %v372
    %v405 = vunpack.c.l.b16 %v373
    %v406 = vunpack.c.l.b16 %v374
    %v407 = vunpack.c.l.b16 %v375
    %v408 = vpack.c.b16 %v393, %v392
    %v409 = vpack.c.b16 %v395, %v394
    %v410 = vpack.c.b16 %v397, %v396
    %v411 = vpack.c.b16 %v399, %v398
    %v412 = vpack.c.b16 %v401, %v400
    %v413 = vpack.c.b16 %v403, %v402
    %v414 = vpack.c.b16 %v405, %v404
    %v415 = vpack.c.b16 %v407, %v406
    %424 = vmatprep.subr.bf16.mxu0 0
    %425 = vmatpush1.bf16.msra.mxu0 %v415
    %426 = vmatprep.subr.bf16.mxu0 0
    %427 = vmatpush1.bf16.msra.mxu0 %v414
    %428 = vmatprep.subr.bf16.mxu0 0
    %429 = vmatpush1.bf16.msra.mxu0 %v413
    %430 = vmatprep.subr.bf16.mxu0 0
    %431 = vmatpush1.bf16.msra.mxu0 %v412
    %432 = vmatprep.subr.bf16.mxu0 0
    %433 = vmatpush1.bf16.msra.mxu0 %v411
    %434 = vmatprep.subr.bf16.mxu0 0
    %435 = vmatpush1.bf16.msra.mxu0 %v410
    %436 = vmatprep.subr.bf16.mxu0 0
    %437 = vmatpush1.bf16.msra.mxu0 %v409
    %438 = vmatprep.subr.bf16.mxu0 0
    %439 = vmatpush1.bf16.msra.mxu0 %v408
    %440 = vmatprep.subr.bf16.mxu0 0
    %441 = vmatpush2.bf16.msra.mxu0 0
    %442 = vmatprep.subr.bf16.mxu0 0
    %443 = vmatpush2.bf16.msra.mxu0 0
    %444 = vmatprep.subr.bf16.mxu0 0
    %445 = vmatpush2.bf16.msra.mxu0 0
    %446 = vmatprep.subr.bf16.mxu0 0
    %447 = vmatpush2.bf16.msra.mxu0 0
    %448 = vmatprep.subr.bf16.mxu0 0
    %449 = vmatpush2.bf16.msra.mxu0 0
    %450 = vmatprep.subr.bf16.mxu0 0
    %451 = vmatpush2.bf16.msra.mxu0 0
    %452 = vmatprep.subr.bf16.mxu0 0
    %453 = vmatpush2.bf16.msra.mxu0 0
    %454 = vmatprep.subr.bf16.mxu0 0
    %455 = vmatpush2.bf16.msra.mxu0 0
    %456 = vmatprep.mubr.bf16.mxu0 0
    %457 = vmatmul.mubr.bf16.gmra.mxu0 %v352
    %v458 = vpop.f32.mrf.mxu0
    %v459 = vadd.f32 0.0, %v458
    %v460 = vpop.f32.mrf.mxu0
    %v461 = vpop.f32.mrf.mxu0
    %v462 = vadd.f32 0.0, %v461
    %v463 = vpop.f32.mrf.mxu0
    %464 = vmatprep.mubr.bf16.mxu0 0
    %465 = vmatmul.mubr.bf16.gmra.mxu0 %v353
    %v466 = vpop.f32.mrf.mxu0
    %v467 = vadd.f32 0.0, %v466
    %v468 = vpop.f32.mrf.mxu0
    %v469 = vpop.f32.mrf.mxu0
    %v470 = vadd.f32 0.0, %v469
    %v471 = vpop.f32.mrf.mxu0
    %472 = vmatprep.mubr.bf16.mxu0 0
    %473 = vmatmul.mubr.bf16.gmra.mxu0 %v354
    %v474 = vpop.f32.mrf.mxu0
    %v475 = vadd.f32 0.0, %v474
    %v476 = vpop.f32.mrf.mxu0
    %v477 = vpop.f32.mrf.mxu0
    %v478 = vadd.f32 0.0, %v477
    %v479 = vpop.f32.mrf.mxu0
    %480 = vmatprep.mubr.bf16.mxu0 0
    %481 = vmatmul.mubr.bf16.gmra.mxu0 %v355
    %v482 = vpop.f32.mrf.mxu0
    %v483 = vadd.f32 0.0, %v482
    %v484 = vpop.f32.mrf.mxu0
    %v485 = vpop.f32.mrf.mxu0
    %v486 = vadd.f32 0.0, %v485
    %v487 = vpop.f32.mrf.mxu0
    %488 = vmatprep.mubr.bf16.mxu0 0
    %489 = vmatmul.mubr.bf16.gmra.mxu0 %v356
    %v490 = vpop.f32.mrf.mxu0
    %v491 = vadd.f32 0.0, %v490
    %v492 = vpop.f32.mrf.mxu0
    %v493 = vpop.f32.mrf.mxu0
    %v494 = vadd.f32 0.0, %v493
    %v495 = vpop.f32.mrf.mxu0
    %496 = vmatprep.mubr.bf16.mxu0 0
    %497 = vmatmul.mubr.bf16.gmra.mxu0 %v357
    %v498 = vpop.f32.mrf.mxu0
    %v499 = vadd.f32 0.0, %v498
    %v500 = vpop.f32.mrf.mxu0
    %v501 = vpop.f32.mrf.mxu0
    %v502 = vadd.f32 0.0, %v501
    %v503 = vpop.f32.mrf.mxu0
    %504 = vmatprep.mubr.bf16.mxu0 0
    %505 = vmatmul.mubr.bf16.gmra.mxu0 %v358
    %v506 = vpop.f32.mrf.mxu0
    %v507 = vadd.f32 0.0, %v506
    %v508 = vpop.f32.mrf.mxu0
    %v509 = vpop.f32.mrf.mxu0
    %v510 = vadd.f32 0.0, %v509
    %v511 = vpop.f32.mrf.mxu0
    %512 = vmatprep.mubr.bf16.mxu0 0
    %513 = vmatmul.mubr.bf16.gmra.mxu0 %v359
    %v514 = vpop.f32.mrf.mxu0
    %v515 = vadd.f32 0.0, %v514
    %v516 = vpop.f32.mrf.mxu0
    %v517 = vpop.f32.mrf.mxu0
    %v518 = vadd.f32 0.0, %v517
    %v519 = vpop.f32.mrf.mxu0
    %520 = vdwg.mxu0
    %v521 = vpack.c.bf16 %v462, %v459
    %v522 = vpack.c.bf16 %v470, %v467
    %v523 = vpack.c.bf16 %v478, %v475
    %v524 = vpack.c.bf16 %v486, %v483
    %v525 = vpack.c.bf16 %v494, %v491
    %v526 = vpack.c.bf16 %v502, %v499
    %v527 = vpack.c.bf16 %v510, %v507
    %v528 = vpack.c.bf16 %v518, %v515
    %v537 = vunpack.c.l.b16 %v521
    %v538 = vunpack.c.h.b16 %v521
    %v539 = vunpack.c.l.b16 %v522
    %v540 = vunpack.c.h.b16 %v522
    %v541 = vunpack.c.l.b16 %v523
    %v542 = vunpack.c.h.b16 %v523
    %v543 = vunpack.c.l.b16 %v524
    %v544 = vunpack.c.h.b16 %v524
    %v545 = vunpack.c.l.b16 %v525
    %v546 = vunpack.c.h.b16 %v525
    %v547 = vunpack.c.l.b16 %v526
    %v548 = vunpack.c.h.b16 %v526
    %v549 = vunpack.c.l.b16 %v527
    %v550 = vunpack.c.h.b16 %v527
    %v551 = vunpack.c.l.b16 %v528
    %v552 = vunpack.c.h.b16 %v528
    %v553 = vpack.c.b16 %v537, %v537
    %v554 = vpack.c.b16 %v538, %v538
    %v555 = vpack.c.b16 %v539, %v539
    %v556 = vpack.c.b16 %v540, %v540
    %v557 = vpack.c.b16 %v541, %v541
    %v558 = vpack.c.b16 %v542, %v542
    %v559 = vpack.c.b16 %v543, %v543
    %v560 = vpack.c.b16 %v544, %v544
    %v561 = vpack.c.b16 %v545, %v545
    %v562 = vpack.c.b16 %v546, %v546
    %v563 = vpack.c.b16 %v547, %v547
    %v564 = vpack.c.b16 %v548, %v548
    %v565 = vpack.c.b16 %v549, %v549
    %v566 = vpack.c.b16 %v550, %v550
    %v567 = vpack.c.b16 %v551, %v551
    %v568 = vpack.c.b16 %v552, %v552
    %585 = vst [vmem:[%s3] sm:$0xf] %v553
    %586 = vst [vmem:[%s3 + $0x4] sm:$0xf] %v554
    %587 = vst [vmem:[%s3 + $0x8] sm:$0xf] %v555
    %588 = vst [vmem:[%s3 + $0xc] sm:$0xf] %v556
    %589 = vst [vmem:[%s3 + $0x10] sm:$0xf] %v557
    %590 = vst [vmem:[%s3 + $0x14] sm:$0xf] %v558
    %591 = vst [vmem:[%s3 + $0x18] sm:$0xf] %v559
    %592 = vst [vmem:[%s3 + $0x1c] sm:$0xf] %v560
    %593 = vst [vmem:[%s3 + $0x20] sm:$0xf] %v561
    %594 = vst [vmem:[%s3 + $0x24] sm:$0xf] %v562
    %595 = vst [vmem:[%s3 + $0x28] sm:$0xf] %v563
    %596 = vst [vmem:[%s3 + $0x2c] sm:$0xf] %v564
    %597 = vst [vmem:[%s3 + $0x30] sm:$0xf] %v565
    %598 = vst [vmem:[%s3 + $0x34] sm:$0xf] %v566
    %599 = vst [vmem:[%s3 + $0x38] sm:$0xf] %v567
    %600 = vst [vmem:[%s3 + $0x3c] sm:$0xf] %v568
  $region25: #{gcn_forward.4} parent=0 // pred_fallthru
    _
  // Predicated region
  $region26: #{gcn_forward.4} parent=0 // pred_check
    _
  $region27: #{gcn_forward.4} parent=0 // pred_check_branch
    %602 = sbr.rel (0) target = $region29
  $region28: #{gcn_forward.4} parent=0 // pred_region
    _
  $region29: #{gcn_forward.4} parent=0 // pred_fallthru
    _
  // Predicated region
  $region30: #{gcn_forward.4} parent=0 // pred_check
    _
  $region31: #{gcn_forward.4} parent=0 // pred_check_branch
    %604 = sbr.rel (0) target = $region33
  $region32: #{gcn_forward.4} parent=0 // pred_region
    _
  $region33: #{gcn_forward.4} parent=0 // pred_fallthru
    _

</llo_original>
